<compile_context>
chip_gen: v7x
topology: tpu7x:2x2x1
jax: 0.10.0
libtpu: 0.0.40
codegen_flags: <defaults>
</compile_context>

<pallas_src>
import functools

import jax
import jax.numpy as jnp
from jax import lax
from jax.experimental import pallas as pl
from jax.experimental.pallas import tpu as pltpu

_LANE = 128


def _l2_normalize(v):
    # Matches torch: v / v.norm(dim=-1, keepdim=True).  No epsilon by design:
    # an all-zero row yields inf/NaN exactly like the PyTorch module.
    return v * lax.rsqrt(jnp.sum(v * v, axis=-1, keepdims=True))


def _robust_aug_kernel(x_ref, *refs, alpha, temperature, m_valid, mm_dtype, tied):
    if tied:
        keys_ref, o_ref = refs               # keys: (Mp, D) -- doubles as values
    else:
        keys_t_ref, vals_ref, o_ref = refs   # keys_t: (D, Mp), vals: (Mp, D)

    # Row L2-normalization in f32 regardless of input dtype.
    x = x_ref[...].astype(jnp.float32)
    query = _l2_normalize(x)
    q_mm = query.astype(mm_dtype)

    if tied:
        keys = keys_ref[...].astype(mm_dtype)
        # query (TB, D) x keys (Mp, D): contract the shared last dim so the
        # tied memory stays a single resident (Mp, D) copy.
        cosine = lax.dot_general(
            q_mm, keys,
            dimension_numbers=(((1,), (1,)), ((), ())),
            preferred_element_type=jnp.float32)
    else:
        # Keys pre-transposed once in the wrapper -> natural MXU layout,
        # no per-grid-step relayout of the (constant) key block.
        cosine = jnp.dot(q_mm, keys_t_ref[...].astype(mm_dtype),
                         preferred_element_type=jnp.float32)

    # softmax(cosine / temperature, dim=-1) in f32, masking padded memory slots.
    logits = cosine * (1.0 / temperature)
    if m_valid < logits.shape[-1]:
        col = lax.broadcasted_iota(jnp.int32, logits.shape, 1)
        logits = jnp.where(col < m_valid, logits, -jnp.inf)
    m = jnp.max(logits, axis=-1, keepdims=True)
    e = jnp.exp(logits - m)
    # approx=True -> EUP vrcp (free slot).  The per-row uniform scale error
    # cancels exactly under the L2 normalization of `retrieved` below.
    inv_denom = pl.reciprocal(jnp.sum(e, axis=-1, keepdims=True), approx=True)
    weights = (e * inv_denom).astype(mm_dtype)

    vals = keys if tied else vals_ref[...].astype(mm_dtype)
    retrieved = jnp.dot(weights, vals, preferred_element_type=jnp.float32)
    retrieved = _l2_normalize(retrieved)

    interpolated = (1.0 - alpha) * query + alpha * retrieved
    o_ref[...] = _l2_normalize(interpolated).astype(o_ref.dtype)


def _tpu_vmem_bytes():
    """Physical VMEM per core (128 MiB v5e/v6e, 64 MiB v7x); safe fallback."""
    try:
        info = pltpu.get_tpu_info()
        v = getattr(info, "vmem_capacity_bytes", None)
        if v:
            return int(v)
    except Exception:
        pass
    return 128 << 20


def _resident_spec(shape):
    # Constant index_map -> block is fetched exactly once; single-buffer it so
    # the never-changing memory doesn't occupy 2x VMEM.
    idx = lambda i: (0,) * len(shape)
    try:
        return pl.BlockSpec(shape, idx, pipeline_mode=pl.Buffered(1))
    except TypeError:  # older JAX without pipeline_mode
        return pl.BlockSpec(shape, idx)


def _pick_block_cap(B, D, Mp, x_itemsize, mem_itemsize, n_mem_blocks, vmem_budget):
    """Largest batch tile that fits the VMEM budget (resident memories + temps)."""
    fixed = n_mem_blocks * Mp * D * mem_itemsize        # single-buffered residents
    per_row = (2 * 2 * D * x_itemsize                   # x + out tiles, double-buffered
               + 2 * D * 4                              # query / retrieved f32 temps
               + 3 * Mp * 4)                            # logits / exp / weights f32 temps
    min_tb = 8 if x_itemsize >= 4 else (16 if x_itemsize == 2 else 32)
    avail = vmem_budget - fixed
    if avail < per_row * min_tb:
        # TODO(synk): M-tiled online-softmax fallback (grid axis over memory
        # slots marked "arbitrary") for memories too large to keep resident
        # (matters on v7x when M*D*itemsize approaches ~24 MiB each).
        cap = min_tb
    else:
        cap = min(512, int(avail // per_row))
    return max(min_tb, min(cap, B)), min_tb


def _choose_tile(B, cap, min_tb, two_cores):
    """Batch tile that divides B when possible (no padding / ragged tail)."""
    if B <= cap:
        # Split only when the chip has 2 TensorCores (v7x); on single-TC chips
        # a split just adds per-step overhead.
        if two_cores and B % 2 == 0 and B // 2 >= min_tb:
            return B // 2
        return B
    for nice in (512, 256, 128):           # MXU-friendly exact divisors first
        if nice <= cap and B % nice == 0:
            return nice
    cand = (cap // 8) * 8
    while cand >= min_tb:
        if B % cand == 0:
            return cand
        cand -= 8
    # No clean divisor: ragged last block.  Its out-of-bounds stores are masked
    # by the Pallas pipeline and the garbage rows it computes are row-local.
    return (cap // 8) * 8


def robust_augmentation(x, key_mem, value_mem=None, *, alpha=0.5,
                        temperature=0.1, block_b=None,
                        prefer_bf16_matmul=False):
    """Pallas equivalent of RobustAugmentation.forward.

    x:         (B, D)
    key_mem:   (M, D)
    value_mem: (M, D) or None (falls back to key_mem, as in the module)
    """
    B, D = x.shape
    M, Dk = key_mem.shape
    assert Dk == D

    if alpha == 0.0:
        # Module early-outs with just the normalized query.
        return _l2_normalize(x.astype(jnp.float32)).astype(x.dtype)

    tied = value_mem is None
    x_itemsize = jnp.dtype(x.dtype).itemsize

    # Opt-in bf16 MXU path when inputs are f32 (f32 accumulation kept).
    if prefer_bf16_matmul and key_mem.dtype == jnp.float32:
        mm_dtype = jnp.bfloat16
        key_mem = key_mem.astype(mm_dtype)
        if value_mem is not None:
            value_mem = value_mem.astype(mm_dtype)
    else:
        mm_dtype = key_mem.dtype
    mem_itemsize = jnp.dtype(key_mem.dtype).itemsize

    # Pad the memory-slot axis to a lane-aligned multiple of 128 with zero
    # rows; padded logits are masked to -inf in-kernel before the softmax.
    Mp = ((M + _LANE - 1) // _LANE) * _LANE
    pad_m = Mp - M

    if tied:
        keys_in = key_mem if pad_m == 0 else jnp.pad(key_mem, ((0, pad_m), (0, 0)))
        operands = (x, keys_in)
        mem_shapes = ((Mp, D),)
    else:
        keys_t = key_mem.T                                # (D, M), one-time transpose
        vals_in = value_mem
        if pad_m:
            keys_t = jnp.pad(keys_t, ((0, 0), (0, pad_m)))
            vals_in = jnp.pad(vals_in, ((0, pad_m), (0, 0)))
        operands = (x, keys_t, vals_in)
        mem_shapes = ((D, Mp), (Mp, D))

    # Generation-aware VMEM plan, communicated to the compiler below.
    phys_vmem = _tpu_vmem_bytes()             # 128 MiB (v5e/v6e) or 64 MiB (v7x)
    vmem_budget = (phys_vmem * 3) // 4        # ~96 MiB / ~48 MiB working budget
    two_cores = phys_vmem <= (64 << 20)       # heuristic: v7x (2 TCs per chip)

    cap, min_tb = _pick_block_cap(B, D, Mp, x_itemsize, mem_itemsize,
                                  len(mem_shapes), vmem_budget)
    tb = int(block_b) if block_b is not None else _choose_tile(B, cap, min_tb, two_cores)
    tb = max(1, min(tb, B))
    n_blocks = pl.cdiv(B, tb)

    kernel = functools.partial(
        _robust_aug_kernel, alpha=float(alpha), temperature=float(temperature),
        m_valid=int(M), mm_dtype=mm_dtype, tied=tied)

    mem_bytes = sum(s[0] * s[1] for s in mem_shapes) * mem_itemsize
    cost = pl.CostEstimate(
        flops=int(4 * B * Mp * D + 12 * B * D + 6 * B * Mp),
        transcendentals=int(B * Mp + 3 * B),
        bytes_accessed=int(2 * B * D * x_itemsize + mem_bytes),
    )

    in_specs = [pl.BlockSpec((tb, D), lambda i: (i, 0))]      # x tile over batch
    in_specs += [_resident_spec(s) for s in mem_shapes]        # resident memories
    out_spec = pl.BlockSpec((tb, D), lambda i: (i, 0))

    vmem_limit = int(min(phys_vmem - (8 << 20), vmem_budget + (16 << 20)))

    out = pl.pallas_call(
        kernel,
        out_shape=jax.ShapeDtypeStruct((B, D), x.dtype),
        grid_spec=pltpu.PrefetchScalarGridSpec(
            num_scalar_prefetch=0,
            grid=(n_blocks,),
            in_specs=in_specs,
            out_specs=out_spec,
        ),
        compiler_params=pltpu.CompilerParams(
            dimension_semantics=("parallel",),
            vmem_limit_bytes=vmem_limit,
        ),
        cost_estimate=cost,
    )(*operands)
    return out


def _reference(x, key_mem, value_mem, alpha, temperature):
    # Pure-JAX reference mirroring the PyTorch forward (f32 math).
    x = x.astype(jnp.float32)
    km = key_mem.astype(jnp.float32)
    q = x / jnp.linalg.norm(x, axis=-1, keepdims=True)
    if alpha == 0.0:
        return q
    sim = q @ km.T
    w = jax.nn.softmax(sim / temperature, axis=-1)
    vals = km if value_mem is None else value_mem.astype(jnp.float32)
    r = w @ vals
    r = r / jnp.linalg.norm(r, axis=-1, keepdims=True)
    out = (1.0 - alpha) * q + alpha * r
    return out / jnp.linalg.norm(out, axis=-1, keepdims=True)


if __name__ == "__main__":
    # Small, TPU-friendly shapes consistent with the module's forward:
    #   x: (batch, embedding_dim), memory: (num_slots, embedding_dim)
    # M=64 deliberately exercises the lane-padding + -inf masking path.
    B, D, M = 256, 128, 64
    alpha, temperature = 0.5, 0.1

    key = jax.random.PRNGKey(0)
    kx, kk, kv = jax.random.split(key, 3)
    x = jax.random.normal(kx, (B, D), dtype=jnp.float32)
    key_mem = jax.random.normal(kk, (M, D), dtype=jnp.float32)
    value_mem = jax.random.normal(kv, (M, D), dtype=jnp.float32)

    # f32 path with explicit value memory.
    out = jax.block_until_ready(
        robust_augmentation(x, key_mem, value_mem, alpha=alpha,
                            temperature=temperature))
    ref = _reference(x, key_mem, value_mem, alpha, temperature)
    assert out.shape == (B, D)
    assert jnp.allclose(out, ref, atol=5e-5, rtol=5e-5), (
        f"f32 max abs err {jnp.max(jnp.abs(out - ref))}")

    # Tied-memory path (value_mem is None -> single resident memory copy).
    out_t = jax.block_until_ready(
        robust_augmentation(x, key_mem, None, alpha=alpha,
                            temperature=temperature))
    ref_t = _reference(x, key_mem, None, alpha, temperature)
    assert jnp.allclose(out_t, ref_t, atol=5e-5, rtol=5e-5), (
        f"tied max abs err {jnp.max(jnp.abs(out_t - ref_t))}")

    # bf16 memory path (MXU operands stay bf16, accumulation f32).
    x_bf, k_bf, v_bf = (a.astype(jnp.bfloat16) for a in (x, key_mem, value_mem))
    out_bf = jax.block_until_ready(
        robust_augmentation(x_bf, k_bf, v_bf, alpha=alpha,
                            temperature=temperature))
    ref_bf = _reference(x_bf, k_bf, v_bf, alpha, temperature)
    assert jnp.allclose(out_bf.astype(jnp.float32), ref_bf,
                        atol=5e-2, rtol=5e-2), (
        f"bf16 max abs err "
        f"{jnp.max(jnp.abs(out_bf.astype(jnp.float32) - ref_bf))}")

    # Opt-in bf16 MXU path on f32 inputs.
    out_mm = jax.block_until_ready(
        robust_augmentation(x, key_mem, value_mem, alpha=alpha,
                            temperature=temperature, prefer_bf16_matmul=True))
    assert jnp.allclose(out_mm, ref, atol=5e-2, rtol=5e-2), (
        f"bf16-matmul max abs err {jnp.max(jnp.abs(out_mm - ref))}")

    # alpha == 0 early-out path (no kernel launch, matches module semantics).
    out0 = jax.block_until_ready(
        robust_augmentation(x, key_mem, value_mem, alpha=0.0,
                            temperature=temperature))
    ref0 = _reference(x, key_mem, value_mem, 0.0, temperature)
    assert jnp.allclose(out0, ref0, atol=1e-5, rtol=1e-5)

    print("KERNEL_OK")
</pallas_src>

<mosaic_0001>
module attributes {stable_mosaic.version = 11 : i64} {
  func.func @_robust_aug_kernel(%arg0: i32, %arg1: memref<256x128xf32, #tpu.memory_space<vmem>>, %arg2: memref<128x128xf32, #tpu.memory_space<vmem>>, %arg3: memref<128x128xf32, #tpu.memory_space<vmem>>, %arg4: memref<256x128xf32, #tpu.memory_space<vmem>>) attributes {dimension_semantics = [#tpu.dimension_semantics<parallel>], iteration_bounds = array<i64: 1>, scalar_prefetch = 0 : i64, scratch_operands = 0 : i64, tpu.core_type = #tpu.core_type<tc>, window_params = [{transform_indices = @transform_0, window_bounds = array<i64: 256, 128>}, {pipeline_mode = #tpu.pipeline_mode<synchronous>, transform_indices = @transform_1, window_bounds = array<i64: 128, 128>}, {pipeline_mode = #tpu.pipeline_mode<synchronous>, transform_indices = @transform_2, window_bounds = array<i64: 128, 128>}, {transform_indices = @transform_3, window_bounds = array<i64: 256, 128>}]} {
    %c0 = arith.constant 0 : index
    %c0_0 = arith.constant 0 : index
    %0 = vector.load %arg1[%c0, %c0_0] : memref<256x128xf32, #tpu.memory_space<vmem>>, vector<256x128xf32>
    %1 = arith.mulf %0, %0 : vector<256x128xf32>
    %cst = arith.constant dense<0.000000e+00> : vector<256xf32>
    %2 = vector.multi_reduction <add>, %1, %cst [1] : vector<256x128xf32> to vector<256xf32>
    %3 = vector.shape_cast %2 : vector<256xf32> to vector<256x1xf32>
    %4 = math.rsqrt %3 : vector<256x1xf32>
    %5 = vector.broadcast %4 : vector<256x1xf32> to vector<256x128xf32>
    %6 = arith.mulf %0, %5 : vector<256x128xf32>
    %c0_1 = arith.constant 0 : index
    %c0_2 = arith.constant 0 : index
    %7 = vector.load %arg2[%c0_1, %c0_2] : memref<128x128xf32, #tpu.memory_space<vmem>>, vector<128x128xf32>
    %cst_3 = arith.constant dense<0.000000e+00> : vector<256x128xf32>
    %8 = tpu.matmul %6, %7, %cst_3 {dimension_numbers = #tpu.dot_dimension_numbers<[1], [0], [0], [1], [0, 0, 1, 1], [], []>} : vector<256x128xf32>, vector<128x128xf32>, vector<256x128xf32> -> vector<256x128xf32>
    %cst_4 = arith.constant 1.000000e+01 : f32
    %9 = vector.broadcast %cst_4 : f32 to vector<256x128xf32>
    %10 = arith.mulf %8, %9 : vector<256x128xf32>
    %11 = tpu.iota {dimensions = array<i32: 1>} : vector<256x128xi32>
    %c64_i32 = arith.constant 64 : i32
    %12 = vector.broadcast %c64_i32 : i32 to vector<256x128xi32>
    %13 = arith.cmpi slt, %11, %12 : vector<256x128xi32>
    %cst_5 = arith.constant 0xFF800000 : f32
    %14 = vector.broadcast %cst_5 : f32 to vector<256x128xf32>
    %15 = arith.select %13, %10, %14 : vector<256x128xi1>, vector<256x128xf32>
    %cst_6 = arith.constant dense<0xFF800000> : vector<256xf32>
    %16 = vector.multi_reduction <maximumf>, %15, %cst_6 [1] : vector<256x128xf32> to vector<256xf32>
    %17 = vector.shape_cast %16 : vector<256xf32> to vector<256x1xf32>
    %18 = vector.broadcast %17 : vector<256x1xf32> to vector<256x128xf32>
    %19 = arith.subf %15, %18 : vector<256x128xf32>
    %20 = math.exp %19 : vector<256x128xf32>
    %cst_7 = arith.constant dense<0.000000e+00> : vector<256xf32>
    %21 = vector.multi_reduction <add>, %20, %cst_7 [1] : vector<256x128xf32> to vector<256xf32>
    %22 = vector.shape_cast %21 : vector<256xf32> to vector<256x1xf32>
    %23 = tpu.reciprocal %22 {approx = true} : vector<256x1xf32> -> vector<256x1xf32>
    %24 = vector.broadcast %23 : vector<256x1xf32> to vector<256x128xf32>
    %25 = arith.mulf %20, %24 : vector<256x128xf32>
    %c0_8 = arith.constant 0 : index
    %c0_9 = arith.constant 0 : index
    %26 = vector.load %arg3[%c0_8, %c0_9] : memref<128x128xf32, #tpu.memory_space<vmem>>, vector<128x128xf32>
    %cst_10 = arith.constant dense<0.000000e+00> : vector<256x128xf32>
    %27 = tpu.matmul %25, %26, %cst_10 {dimension_numbers = #tpu.dot_dimension_numbers<[1], [0], [0], [1], [0, 0, 1, 1], [], []>} : vector<256x128xf32>, vector<128x128xf32>, vector<256x128xf32> -> vector<256x128xf32>
    %28 = arith.mulf %27, %27 : vector<256x128xf32>
    %cst_11 = arith.constant dense<0.000000e+00> : vector<256xf32>
    %29 = vector.multi_reduction <add>, %28, %cst_11 [1] : vector<256x128xf32> to vector<256xf32>
    %30 = vector.shape_cast %29 : vector<256xf32> to vector<256x1xf32>
    %31 = math.rsqrt %30 : vector<256x1xf32>
    %32 = vector.broadcast %31 : vector<256x1xf32> to vector<256x128xf32>
    %33 = arith.mulf %27, %32 : vector<256x128xf32>
    %cst_12 = arith.constant 5.000000e-01 : f32
    %34 = vector.broadcast %cst_12 : f32 to vector<256x128xf32>
    %35 = arith.mulf %34, %6 : vector<256x128xf32>
    %cst_13 = arith.constant 5.000000e-01 : f32
    %36 = vector.broadcast %cst_13 : f32 to vector<256x128xf32>
    %37 = arith.mulf %36, %33 : vector<256x128xf32>
    %38 = arith.addf %35, %37 : vector<256x128xf32>
    %39 = arith.mulf %38, %38 : vector<256x128xf32>
    %cst_14 = arith.constant dense<0.000000e+00> : vector<256xf32>
    %40 = vector.multi_reduction <add>, %39, %cst_14 [1] : vector<256x128xf32> to vector<256xf32>
    %41 = vector.shape_cast %40 : vector<256xf32> to vector<256x1xf32>
    %42 = math.rsqrt %41 : vector<256x1xf32>
    %43 = vector.broadcast %42 : vector<256x1xf32> to vector<256x128xf32>
    %44 = arith.mulf %38, %43 : vector<256x128xf32>
    %c0_15 = arith.constant 0 : index
    %c0_16 = arith.constant 0 : index
    %45 = vector.load %arg4[%c0_15, %c0_16] : memref<256x128xf32, #tpu.memory_space<vmem>>, vector<256x128xf32>
    tpu.vector_store %arg4[%c0_15, %c0_16], %44 {strides = array<i32>} : memref<256x128xf32, #tpu.memory_space<vmem>>, vector<256x128xf32>,
    return
  }
  func.func @transform_0(%arg0: i32) -> (i32, i32) {
    %c0_i32 = arith.constant 0 : i32
    %c0_i32_0 = arith.constant 0 : i32
    return %arg0, %c0_i32 : i32, i32
  }
  func.func @transform_1(%arg0: i32) -> (i32, i32) {
    %c0_i32 = arith.constant 0 : i32
    %c0_i32_0 = arith.constant 0 : i32
    %c0_i32_1 = arith.constant 0 : i32
    return %c0_i32, %c0_i32_0 : i32, i32
  }
  func.func @transform_2(%arg0: i32) -> (i32, i32) {
    %c0_i32 = arith.constant 0 : i32
    %c0_i32_0 = arith.constant 0 : i32
    %c0_i32_1 = arith.constant 0 : i32
    return %c0_i32, %c0_i32_0 : i32, i32
  }
  func.func @transform_3(%arg0: i32) -> (i32, i32) {
    %c0_i32 = arith.constant 0 : i32
    %c0_i32_0 = arith.constant 0 : i32
    return %arg0, %c0_i32 : i32, i32
  }
}

</mosaic_0001>

<llo_original>
// kernel: tpu_custom_call.1
$region0: #{tpu_custom_call.1}
  #allocation0 [shape = 'u32[]', space=smem, size = 0x4, offset = 0x4, fixed_abs, tag = 'smem constant byte address 0x4 - core index']
  #allocation1 [shape = 'u32[144,128]{1,0:T(1,128)}', space=vmem, size = 0x12000, scoped, tag = 'internal scratch']
  %s0 = inlined_call_operand.hbm [shape: f32[256,128], index: 0, kind: input, shape index: {}]
  %s1 = inlined_call_operand.hbm [shape: f32[128,128], index: 1, kind: input, shape index: {}]
  %s2 = inlined_call_operand.hbm [shape: f32[128,128], index: 2, kind: input, shape index: {}]
  %s3 = inlined_call_operand.hbm [shape: f32[256,128], index: 3, kind: output, shape index: {}]
  %s4 = sld [smem:[#allocation0]]
  $region34: #{tpu_custom_call.1} parent=0
    _
  %s6 = ssub.s32 1, %s4
  %s7 = scalar_select 0, %s6, %s4
  $region1: #{tpu_custom_call.1} parent=0
    #allocation2 [shape = 'u8[131072]{0}', space=vmem, size = 0x20000, scoped, tag = 'input window, operand 0, single buffered']
    #allocation3 [shape = 's32[1]{0}', space=sflag, size = 0x4, scoped, tag = 'scoped memory for tpu_custom_call.1']
    #allocation4 [shape = 's32[1]{0}', space=sflag, size = 0x4, scoped, tag = 'scoped memory for tpu_custom_call.1']
    #allocation5 [shape = 'u8[65536]{0}', space=vmem, size = 0x10000, scoped, tag = 'input window, operand 1, single buffered']
    #allocation6 [shape = 's32[1]{0}', space=sflag, size = 0x4, scoped, tag = 'scoped memory for tpu_custom_call.1']
    #allocation7 [shape = 'u8[65536]{0}', space=vmem, size = 0x10000, scoped, tag = 'input window, operand 2, single buffered']
    #allocation8 [shape = 'u8[131072]{0}', space=vmem, size = 0x20000, scoped, tag = 'output window, operand 0, single buffered']
    %8 = vsyncpa [#allocation3], 0
    %9 = vsyncpa [#allocation6], 0
    %10 = vsyncpa [#allocation4], 0
    // Predicated region
    $region2: #{tpu_custom_call.1} parent=1 // pred_check
      _
    $region3: #{tpu_custom_call.1} parent=1 // pred_check_branch
      %12 = sbr.rel (0) target = $region5
    $region4: #{tpu_custom_call.1} parent=1 // pred_region
      %s14 = ssub.s32 4096, 4096
      %15 = vsyncadd [#allocation3], %s14
      %s16 = sshll.u32 [#allocation2], 4
      %s17 = int_to_ptr.vmem [resolvable:$true] %s16
      %22 = dma.hbm_to_vmem [thread:$0]  %s0, 4096, %s17, [#allocation3], 128, 128, 8
    $region5: #{tpu_custom_call.1} parent=1 // pred_fallthru
      _
    // Predicated region
    $region6: #{tpu_custom_call.1} parent=1 // pred_check
      _
    $region7: #{tpu_custom_call.1} parent=1 // pred_check_branch
      %24 = sbr.rel (0) target = $region9
    $region8: #{tpu_custom_call.1} parent=1 // pred_region
      %s26 = ssub.s32 2048, 2048
      %27 = vsyncadd [#allocation6], %s26
      %s28 = sshll.u32 [#allocation5], 4
      %s29 = int_to_ptr.vmem [resolvable:$true] %s28
      %34 = dma.hbm_to_vmem [thread:$0]  %s1, 2048, %s29, [#allocation6], 128, 128, 8
    $region9: #{tpu_custom_call.1} parent=1 // pred_fallthru
      _
    // Predicated region
    $region10: #{tpu_custom_call.1} parent=1 // pred_check
      _
    $region11: #{tpu_custom_call.1} parent=1 // pred_check_branch
      %36 = sbr.rel (0) target = $region13
    $region12: #{tpu_custom_call.1} parent=1 // pred_region
      %s38 = ssub.s32 2048, 2048
      %39 = vsyncadd [#allocation6], %s38
      %s40 = sshll.u32 [#allocation7], 4
      %s41 = int_to_ptr.vmem [resolvable:$true] %s40
      %46 = dma.hbm_to_vmem [thread:$0]  %s2, 2048, %s41, [#allocation6], 128, 128, 8
    $region13: #{tpu_custom_call.1} parent=1 // pred_fallthru
      _
    // Predicated region
    $region14: #{tpu_custom_call.1} parent=1 // pred_check
      _
    $region15: #{tpu_custom_call.1} parent=1 // pred_check_branch
      %48 = sbr.rel (0) target = $region17
    $region16: #{tpu_custom_call.1} parent=1 // pred_region
      %49 = dma.done [#allocation3], 4096
    $region17: #{tpu_custom_call.1} parent=1 // pred_fallthru
      _
    // Predicated region
    $region18: #{tpu_custom_call.1} parent=1 // pred_check
      _
    $region19: #{tpu_custom_call.1} parent=1 // pred_check_branch
      %51 = sbr.rel (0) target = $region21
    $region20: #{tpu_custom_call.1} parent=1 // pred_region
      %52 = dma.done [#allocation6], 2048
    $region21: #{tpu_custom_call.1} parent=1 // pred_fallthru
      _
    // Predicated region
    $region22: #{tpu_custom_call.1} parent=1 // pred_check
      _
    $region23: #{tpu_custom_call.1} parent=1 // pred_check_branch
      %54 = sbr.rel (0) target = $region25
    $region24: #{tpu_custom_call.1} parent=1 // pred_region
      %55 = dma.done [#allocation6], 2048
    $region25: #{tpu_custom_call.1} parent=1 // pred_fallthru
      _
    %v56 = vld [vmem:[#allocation2] sm:$0xff]
    %v57 = vld [vmem:[#allocation2 + $0x8] sm:$0xff]
    %v58 = vld [vmem:[#allocation2 + $0x10] sm:$0xff]
    %v59 = vld [vmem:[#allocation2 + $0x18] sm:$0xff]
    %v60 = vld [vmem:[#allocation2 + $0x20] sm:$0xff]
    %v61 = vld [vmem:[#allocation2 + $0x28] sm:$0xff]
    %v62 = vld [vmem:[#allocation2 + $0x30] sm:$0xff]
    %v63 = vld [vmem:[#allocation2 + $0x38] sm:$0xff]
    %v64 = vld [vmem:[#allocation2 + $0x40] sm:$0xff]
    %v65 = vld [vmem:[#allocation2 + $0x48] sm:$0xff]
    %v66 = vld [vmem:[#allocation2 + $0x50] sm:$0xff]
    %v67 = vld [vmem:[#allocation2 + $0x58] sm:$0xff]
    %v68 = vld [vmem:[#allocation2 + $0x60] sm:$0xff]
    %v69 = vld [vmem:[#allocation2 + $0x68] sm:$0xff]
    %v70 = vld [vmem:[#allocation2 + $0x70] sm:$0xff]
    %v71 = vld [vmem:[#allocation2 + $0x78] sm:$0xff]
    %v72 = vld [vmem:[#allocation2 + $0x80] sm:$0xff]
    %v73 = vld [vmem:[#allocation2 + $0x88] sm:$0xff]
    %v74 = vld [vmem:[#allocation2 + $0x90] sm:$0xff]
    %v75 = vld [vmem:[#allocation2 + $0x98] sm:$0xff]
    %v76 = vld [vmem:[#allocation2 + $0xa0] sm:$0xff]
    %v77 = vld [vmem:[#allocation2 + $0xa8] sm:$0xff]
    %v78 = vld [vmem:[#allocation2 + $0xb0] sm:$0xff]
    %v79 = vld [vmem:[#allocation2 + $0xb8] sm:$0xff]
    %v80 = vld [vmem:[#allocation2 + $0xc0] sm:$0xff]
    %v81 = vld [vmem:[#allocation2 + $0xc8] sm:$0xff]
    %v82 = vld [vmem:[#allocation2 + $0xd0] sm:$0xff]
    %v83 = vld [vmem:[#allocation2 + $0xd8] sm:$0xff]
    %v84 = vld [vmem:[#allocation2 + $0xe0] sm:$0xff]
    %v85 = vld [vmem:[#allocation2 + $0xe8] sm:$0xff]
    %v86 = vld [vmem:[#allocation2 + $0xf0] sm:$0xff]
    %v87 = vld [vmem:[#allocation2 + $0xf8] sm:$0xff]
    %v88 = vmul.f32 %v56, %v56
    %v89 = vmul.f32 %v57, %v57
    %v90 = vmul.f32 %v58, %v58
    %v91 = vmul.f32 %v59, %v59
    %v92 = vmul.f32 %v60, %v60
    %v93 = vmul.f32 %v61, %v61
    %v94 = vmul.f32 %v62, %v62
    %v95 = vmul.f32 %v63, %v63
    %v96 = vmul.f32 %v64, %v64
    %v97 = vmul.f32 %v65, %v65
    %v98 = vmul.f32 %v66, %v66
    %v99 = vmul.f32 %v67, %v67
    %v100 = vmul.f32 %v68, %v68
    %v101 = vmul.f32 %v69, %v69
    %v102 = vmul.f32 %v70, %v70
    %v103 = vmul.f32 %v71, %v71
    %v104 = vmul.f32 %v72, %v72
    %v105 = vmul.f32 %v73, %v73
    %v106 = vmul.f32 %v74, %v74
    %v107 = vmul.f32 %v75, %v75
    %v108 = vmul.f32 %v76, %v76
    %v109 = vmul.f32 %v77, %v77
    %v110 = vmul.f32 %v78, %v78
    %v111 = vmul.f32 %v79, %v79
    %v112 = vmul.f32 %v80, %v80
    %v113 = vmul.f32 %v81, %v81
    %v114 = vmul.f32 %v82, %v82
    %v115 = vmul.f32 %v83, %v83
    %v116 = vmul.f32 %v84, %v84
    %v117 = vmul.f32 %v85, %v85
    %v118 = vmul.f32 %v86, %v86
    %v119 = vmul.f32 %v87, %v87
    %120 = vadd.xlane.f32.xlu0 %v88
    %v121 = vpop.xlane.xlu0 %120
    %122 = vadd.xlane.f32.xlu0 %v89
    %v123 = vpop.xlane.xlu0 %122
    %124 = vadd.xlane.f32.xlu0 %v90
    %v125 = vpop.xlane.xlu0 %124
    %126 = vadd.xlane.f32.xlu0 %v91
    %v127 = vpop.xlane.xlu0 %126
    %128 = vadd.xlane.f32.xlu0 %v92
    %v129 = vpop.xlane.xlu0 %128
    %130 = vadd.xlane.f32.xlu0 %v93
    %v131 = vpop.xlane.xlu0 %130
    %132 = vadd.xlane.f32.xlu0 %v94
    %v133 = vpop.xlane.xlu0 %132
    %134 = vadd.xlane.f32.xlu0 %v95
    %v135 = vpop.xlane.xlu0 %134
    %136 = vadd.xlane.f32.xlu0 %v96
    %v137 = vpop.xlane.xlu0 %136
    %138 = vadd.xlane.f32.xlu0 %v97
    %v139 = vpop.xlane.xlu0 %138
    %140 = vadd.xlane.f32.xlu0 %v98
    %v141 = vpop.xlane.xlu0 %140
    %142 = vadd.xlane.f32.xlu0 %v99
    %v143 = vpop.xlane.xlu0 %142
    %144 = vadd.xlane.f32.xlu0 %v100
    %v145 = vpop.xlane.xlu0 %144
    %146 = vadd.xlane.f32.xlu0 %v101
    %v147 = vpop.xlane.xlu0 %146
    %148 = vadd.xlane.f32.xlu0 %v102
    %v149 = vpop.xlane.xlu0 %148
    %150 = vadd.xlane.f32.xlu0 %v103
    %v151 = vpop.xlane.xlu0 %150
    %152 = vadd.xlane.f32.xlu0 %v104
    %v153 = vpop.xlane.xlu0 %152
    %154 = vadd.xlane.f32.xlu0 %v105
    %v155 = vpop.xlane.xlu0 %154
    %156 = vadd.xlane.f32.xlu0 %v106
    %v157 = vpop.xlane.xlu0 %156
    %158 = vadd.xlane.f32.xlu0 %v107
    %v159 = vpop.xlane.xlu0 %158
    %160 = vadd.xlane.f32.xlu0 %v108
    %v161 = vpop.xlane.xlu0 %160
    %162 = vadd.xlane.f32.xlu0 %v109
    %v163 = vpop.xlane.xlu0 %162
    %164 = vadd.xlane.f32.xlu0 %v110
    %v165 = vpop.xlane.xlu0 %164
    %166 = vadd.xlane.f32.xlu0 %v111
    %v167 = vpop.xlane.xlu0 %166
    %168 = vadd.xlane.f32.xlu0 %v112
    %v169 = vpop.xlane.xlu0 %168
    %170 = vadd.xlane.f32.xlu0 %v113
    %v171 = vpop.xlane.xlu0 %170
    %172 = vadd.xlane.f32.xlu0 %v114
    %v173 = vpop.xlane.xlu0 %172
    %174 = vadd.xlane.f32.xlu0 %v115
    %v175 = vpop.xlane.xlu0 %174
    %176 = vadd.xlane.f32.xlu0 %v116
    %v177 = vpop.xlane.xlu0 %176
    %178 = vadd.xlane.f32.xlu0 %v117
    %v179 = vpop.xlane.xlu0 %178
    %180 = vadd.xlane.f32.xlu0 %v118
    %v181 = vpop.xlane.xlu0 %180
    %182 = vadd.xlane.f32.xlu0 %v119
    %v183 = vpop.xlane.xlu0 %182
    %v184 = vrsqrt.pop %v121
    %v185 = vrsqrt.pop %v123
    %v186 = vrsqrt.pop %v125
    %v187 = vrsqrt.pop %v127
    %v188 = vrsqrt.pop %v129
    %v189 = vrsqrt.pop %v131
    %v190 = vrsqrt.pop %v133
    %v191 = vrsqrt.pop %v135
    %v192 = vrsqrt.pop %v137
    %v193 = vrsqrt.pop %v139
    %v194 = vrsqrt.pop %v141
    %v195 = vrsqrt.pop %v143
    %v196 = vrsqrt.pop %v145
    %v197 = vrsqrt.pop %v147
    %v198 = vrsqrt.pop %v149
    %v199 = vrsqrt.pop %v151
    %v200 = vrsqrt.pop %v153
    %v201 = vrsqrt.pop %v155
    %v202 = vrsqrt.pop %v157
    %v203 = vrsqrt.pop %v159
    %v204 = vrsqrt.pop %v161
    %v205 = vrsqrt.pop %v163
    %v206 = vrsqrt.pop %v165
    %v207 = vrsqrt.pop %v167
    %v208 = vrsqrt.pop %v169
    %v209 = vrsqrt.pop %v171
    %v210 = vrsqrt.pop %v173
    %v211 = vrsqrt.pop %v175
    %v212 = vrsqrt.pop %v177
    %v213 = vrsqrt.pop %v179
    %v214 = vrsqrt.pop %v181
    %v215 = vrsqrt.pop %v183
    %v216 = vmul.f32 %v56, %v184
    %v217 = vmul.f32 %v57, %v185
    %v218 = vmul.f32 %v58, %v186
    %v219 = vmul.f32 %v59, %v187
    %v220 = vmul.f32 %v60, %v188
    %v221 = vmul.f32 %v61, %v189
    %v222 = vmul.f32 %v62, %v190
    %v223 = vmul.f32 %v63, %v191
    %v224 = vmul.f32 %v64, %v192
    %v225 = vmul.f32 %v65, %v193
    %v226 = vmul.f32 %v66, %v194
    %v227 = vmul.f32 %v67, %v195
    %v228 = vmul.f32 %v68, %v196
    %v229 = vmul.f32 %v69, %v197
    %v230 = vmul.f32 %v70, %v198
    %v231 = vmul.f32 %v71, %v199
    %v232 = vmul.f32 %v72, %v200
    %v233 = vmul.f32 %v73, %v201
    %v234 = vmul.f32 %v74, %v202
    %v235 = vmul.f32 %v75, %v203
    %v236 = vmul.f32 %v76, %v204
    %v237 = vmul.f32 %v77, %v205
    %v238 = vmul.f32 %v78, %v206
    %v239 = vmul.f32 %v79, %v207
    %v240 = vmul.f32 %v80, %v208
    %v241 = vmul.f32 %v81, %v209
    %v242 = vmul.f32 %v82, %v210
    %v243 = vmul.f32 %v83, %v211
    %v244 = vmul.f32 %v84, %v212
    %v245 = vmul.f32 %v85, %v213
    %v246 = vmul.f32 %v86, %v214
    %v247 = vmul.f32 %v87, %v215
    %v248 = vld [vmem:[#allocation5] sm:$0xff]
    %v249 = vld [vmem:[#allocation5 + $0x8] sm:$0xff]
    %v250 = vld [vmem:[#allocation5 + $0x10] sm:$0xff]
    %v251 = vld [vmem:[#allocation5 + $0x18] sm:$0xff]
    %v252 = vld [vmem:[#allocation5 + $0x20] sm:$0xff]
    %v253 = vld [vmem:[#allocation5 + $0x28] sm:$0xff]
    %v254 = vld [vmem:[#allocation5 + $0x30] sm:$0xff]
    %v255 = vld [vmem:[#allocation5 + $0x38] sm:$0xff]
    %v256 = vld [vmem:[#allocation5 + $0x40] sm:$0xff]
    %v257 = vld [vmem:[#allocation5 + $0x48] sm:$0xff]
    %v258 = vld [vmem:[#allocation5 + $0x50] sm:$0xff]
    %v259 = vld [vmem:[#allocation5 + $0x58] sm:$0xff]
    %v260 = vld [vmem:[#allocation5 + $0x60] sm:$0xff]
    %v261 = vld [vmem:[#allocation5 + $0x68] sm:$0xff]
    %v262 = vld [vmem:[#allocation5 + $0x70] sm:$0xff]
    %v263 = vld [vmem:[#allocation5 + $0x78] sm:$0xff]
    %264 = vmatprep.subr.mxu0 0.0
    %265 = vmatpush1.msra.mxu0 %v248
    %266 = vmatprep.subr.mxu0 0.0
    %267 = vmatpush1.msra.mxu0 %v249
    %268 = vmatprep.subr.mxu0 0.0
    %269 = vmatpush1.msra.mxu0 %v250
    %270 = vmatprep.subr.mxu0 0.0
    %271 = vmatpush1.msra.mxu0 %v251
    %272 = vmatprep.subr.mxu0 0.0
    %273 = vmatpush1.msra.mxu0 %v252
    %274 = vmatprep.subr.mxu0 0.0
    %275 = vmatpush1.msra.mxu0 %v253
    %276 = vmatprep.subr.mxu0 0.0
    %277 = vmatpush1.msra.mxu0 %v254
    %278 = vmatprep.subr.mxu0 0.0
    %279 = vmatpush1.msra.mxu0 %v255
    %280 = vmatprep.subr.mxu0 0.0
    %281 = vmatpush1.msra.mxu0 %v256
    %282 = vmatprep.subr.mxu0 0.0
    %283 = vmatpush1.msra.mxu0 %v257
    %284 = vmatprep.subr.mxu0 0.0
    %285 = vmatpush1.msra.mxu0 %v258
    %286 = vmatprep.subr.mxu0 0.0
    %287 = vmatpush1.msra.mxu0 %v259
    %288 = vmatprep.subr.mxu0 0.0
    %289 = vmatpush1.msra.mxu0 %v260
    %290 = vmatprep.subr.mxu0 0.0
    %291 = vmatpush1.msra.mxu0 %v261
    %292 = vmatprep.subr.mxu0 0.0
    %293 = vmatpush1.msra.mxu0 %v262
    %294 = vmatprep.subr.mxu0 0.0
    %295 = vmatpush1.msra.mxu0 %v263
    %296 = vmatprep.subr.mxu0 0.0
    %297 = vmatpush1.msra.mxu0 0.0
    %298 = vmatprep.subr.mxu0 0.0
    %299 = vmatpush1.msra.mxu0 0.0
    %300 = vmatprep.subr.mxu0 0.0
    %301 = vmatpush1.msra.mxu0 0.0
    %302 = vmatprep.subr.mxu0 0.0
    %303 = vmatpush1.msra.mxu0 0.0
    %304 = vmatprep.subr.mxu0 0.0
    %305 = vmatpush1.msra.mxu0 0.0
    %306 = vmatprep.subr.mxu0 0.0
    %307 = vmatpush1.msra.mxu0 0.0
    %308 = vmatprep.subr.mxu0 0.0
    %309 = vmatpush1.msra.mxu0 0.0
    %310 = vmatprep.subr.mxu0 0.0
    %311 = vmatpush1.msra.mxu0 0.0
    %312 = vmatprep.subr.mxu0 0.0
    %313 = vmatpush1.msra.mxu0 0.0
    %314 = vmatprep.subr.mxu0 0.0
    %315 = vmatpush1.msra.mxu0 0.0
    %316 = vmatprep.subr.mxu0 0.0
    %317 = vmatpush1.msra.mxu0 0.0
    %318 = vmatprep.subr.mxu0 0.0
    %319 = vmatpush1.msra.mxu0 0.0
    %320 = vmatprep.subr.mxu0 0.0
    %321 = vmatpush1.msra.mxu0 0.0
    %322 = vmatprep.subr.mxu0 0.0
    %323 = vmatpush1.msra.mxu0 0.0
    %324 = vmatprep.subr.mxu0 0.0
    %325 = vmatpush1.msra.mxu0 0.0
    %326 = vmatprep.subr.mxu0 0.0
    %327 = vmatpush1.msra.mxu0 0.0
    %328 = vmatprep.mubr.f32.mxu0 0.0
    %329 = vmatmul.mubr.f32.gmra.mrb[0].mxu0 %v216
    %v330 = vpop.f32.mrb[0].mxu0
    %v331 = vadd.f32 0.0, %v330
    %v332 = vpop.f32.mrb[0].mxu0
    %333 = vmatprep.mubr.f32.mxu0 0.0
    %334 = vmatmul.mubr.f32.gmra.mrb[0].mxu0 %v217
    %v335 = vpop.f32.mrb[0].mxu0
    %v336 = vadd.f32 0.0, %v335
    %v337 = vpop.f32.mrb[0].mxu0
    %338 = vmatprep.mubr.f32.mxu0 0.0
    %339 = vmatmul.mubr.f32.gmra.mrb[0].mxu0 %v218
    %v340 = vpop.f32.mrb[0].mxu0
    %v341 = vadd.f32 0.0, %v340
    %v342 = vpop.f32.mrb[0].mxu0
    %343 = vmatprep.mubr.f32.mxu0 0.0
    %344 = vmatmul.mubr.f32.gmra.mrb[0].mxu0 %v219
    %v345 = vpop.f32.mrb[0].mxu0
    %v346 = vadd.f32 0.0, %v345
    %v347 = vpop.f32.mrb[0].mxu0
    %348 = vmatprep.mubr.f32.mxu0 0.0
    %349 = vmatmul.mubr.f32.gmra.mrb[0].mxu0 %v220
    %v350 = vpop.f32.mrb[0].mxu0
    %v351 = vadd.f32 0.0, %v350
    %v352 = vpop.f32.mrb[0].mxu0
    %353 = vmatprep.mubr.f32.mxu0 0.0
    %354 = vmatmul.mubr.f32.gmra.mrb[0].mxu0 %v221
    %v355 = vpop.f32.mrb[0].mxu0
    %v356 = vadd.f32 0.0, %v355
    %v357 = vpop.f32.mrb[0].mxu0
    %358 = vmatprep.mubr.f32.mxu0 0.0
    %359 = vmatmul.mubr.f32.gmra.mrb[0].mxu0 %v222
    %v360 = vpop.f32.mrb[0].mxu0
    %v361 = vadd.f32 0.0, %v360
    %v362 = vpop.f32.mrb[0].mxu0
    %363 = vmatprep.mubr.f32.mxu0 0.0
    %364 = vmatmul.mubr.f32.gmra.mrb[0].mxu0 %v223
    %v365 = vpop.f32.mrb[0].mxu0
    %v366 = vadd.f32 0.0, %v365
    %v367 = vpop.f32.mrb[0].mxu0
    %368 = vmatprep.mubr.f32.mxu0 0.0
    %369 = vmatmul.mubr.f32.gmra.mrb[0].mxu0 %v224
    %v370 = vpop.f32.mrb[0].mxu0
    %v371 = vadd.f32 0.0, %v370
    %v372 = vpop.f32.mrb[0].mxu0
    %373 = vmatprep.mubr.f32.mxu0 0.0
    %374 = vmatmul.mubr.f32.gmra.mrb[0].mxu0 %v225
    %v375 = vpop.f32.mrb[0].mxu0
    %v376 = vadd.f32 0.0, %v375
    %v377 = vpop.f32.mrb[0].mxu0
    %378 = vmatprep.mubr.f32.mxu0 0.0
    %379 = vmatmul.mubr.f32.gmra.mrb[0].mxu0 %v226
    %v380 = vpop.f32.mrb[0].mxu0
    %v381 = vadd.f32 0.0, %v380
    %v382 = vpop.f32.mrb[0].mxu0
    %383 = vmatprep.mubr.f32.mxu0 0.0
    %384 = vmatmul.mubr.f32.gmra.mrb[0].mxu0 %v227
    %v385 = vpop.f32.mrb[0].mxu0
    %v386 = vadd.f32 0.0, %v385
    %v387 = vpop.f32.mrb[0].mxu0
    %388 = vmatprep.mubr.f32.mxu0 0.0
    %389 = vmatmul.mubr.f32.gmra.mrb[0].mxu0 %v228
    %v390 = vpop.f32.mrb[0].mxu0
    %v391 = vadd.f32 0.0, %v390
    %v392 = vpop.f32.mrb[0].mxu0
    %393 = vmatprep.mubr.f32.mxu0 0.0
    %394 = vmatmul.mubr.f32.gmra.mrb[0].mxu0 %v229
    %v395 = vpop.f32.mrb[0].mxu0
    %v396 = vadd.f32 0.0, %v395
    %v397 = vpop.f32.mrb[0].mxu0
    %398 = vmatprep.mubr.f32.mxu0 0.0
    %399 = vmatmul.mubr.f32.gmra.mrb[0].mxu0 %v230
    %v400 = vpop.f32.mrb[0].mxu0
    %v401 = vadd.f32 0.0, %v400
    %v402 = vpop.f32.mrb[0].mxu0
    %403 = vmatprep.mubr.f32.mxu0 0.0
    %404 = vmatmul.mubr.f32.gmra.mrb[0].mxu0 %v231
    %v405 = vpop.f32.mrb[0].mxu0
    %v406 = vadd.f32 0.0, %v405
    %v407 = vpop.f32.mrb[0].mxu0
    %408 = vmatprep.mubr.f32.mxu0 0.0
    %409 = vmatmul.mubr.f32.gmra.mrb[0].mxu0 %v232
    %v410 = vpop.f32.mrb[0].mxu0
    %v411 = vadd.f32 0.0, %v410
    %v412 = vpop.f32.mrb[0].mxu0
    %413 = vmatprep.mubr.f32.mxu0 0.0
    %414 = vmatmul.mubr.f32.gmra.mrb[0].mxu0 %v233
    %v415 = vpop.f32.mrb[0].mxu0
    %v416 = vadd.f32 0.0, %v415
    %v417 = vpop.f32.mrb[0].mxu0
    %418 = vmatprep.mubr.f32.mxu0 0.0
    %419 = vmatmul.mubr.f32.gmra.mrb[0].mxu0 %v234
    %v420 = vpop.f32.mrb[0].mxu0
    %v421 = vadd.f32 0.0, %v420
    %v422 = vpop.f32.mrb[0].mxu0
    %423 = vmatprep.mubr.f32.mxu0 0.0
    %424 = vmatmul.mubr.f32.gmra.mrb[0].mxu0 %v235
    %v425 = vpop.f32.mrb[0].mxu0
    %v426 = vadd.f32 0.0, %v425
    %v427 = vpop.f32.mrb[0].mxu0
    %428 = vmatprep.mubr.f32.mxu0 0.0
    %429 = vmatmul.mubr.f32.gmra.mrb[0].mxu0 %v236
    %v430 = vpop.f32.mrb[0].mxu0
    %v431 = vadd.f32 0.0, %v430
    %v432 = vpop.f32.mrb[0].mxu0
    %433 = vmatprep.mubr.f32.mxu0 0.0
    %434 = vmatmul.mubr.f32.gmra.mrb[0].mxu0 %v237
    %v435 = vpop.f32.mrb[0].mxu0
    %v436 = vadd.f32 0.0, %v435
    %v437 = vpop.f32.mrb[0].mxu0
    %438 = vmatprep.mubr.f32.mxu0 0.0
    %439 = vmatmul.mubr.f32.gmra.mrb[0].mxu0 %v238
    %v440 = vpop.f32.mrb[0].mxu0
    %v441 = vadd.f32 0.0, %v440
    %v442 = vpop.f32.mrb[0].mxu0
    %443 = vmatprep.mubr.f32.mxu0 0.0
    %444 = vmatmul.mubr.f32.gmra.mrb[0].mxu0 %v239
    %v445 = vpop.f32.mrb[0].mxu0
    %v446 = vadd.f32 0.0, %v445
    %v447 = vpop.f32.mrb[0].mxu0
    %448 = vmatprep.mubr.f32.mxu0 0.0
    %449 = vmatmul.mubr.f32.gmra.mrb[0].mxu0 %v240
    %v450 = vpop.f32.mrb[0].mxu0
    %v451 = vadd.f32 0.0, %v450
    %v452 = vpop.f32.mrb[0].mxu0
    %453 = vmatprep.mubr.f32.mxu0 0.0
    %454 = vmatmul.mubr.f32.gmra.mrb[0].mxu0 %v241
    %v455 = vpop.f32.mrb[0].mxu0
    %v456 = vadd.f32 0.0, %v455
    %v457 = vpop.f32.mrb[0].mxu0
    %458 = vmatprep.mubr.f32.mxu0 0.0
    %459 = vmatmul.mubr.f32.gmra.mrb[0].mxu0 %v242
    %v460 = vpop.f32.mrb[0].mxu0
    %v461 = vadd.f32 0.0, %v460
    %v462 = vpop.f32.mrb[0].mxu0
    %463 = vmatprep.mubr.f32.mxu0 0.0
    %464 = vmatmul.mubr.f32.gmra.mrb[0].mxu0 %v243
    %v465 = vpop.f32.mrb[0].mxu0
    %v466 = vadd.f32 0.0, %v465
    %v467 = vpop.f32.mrb[0].mxu0
    %468 = vmatprep.mubr.f32.mxu0 0.0
    %469 = vmatmul.mubr.f32.gmra.mrb[0].mxu0 %v244
    %v470 = vpop.f32.mrb[0].mxu0
    %v471 = vadd.f32 0.0, %v470
    %v472 = vpop.f32.mrb[0].mxu0
    %473 = vmatprep.mubr.f32.mxu0 0.0
    %474 = vmatmul.mubr.f32.gmra.mrb[0].mxu0 %v245
    %v475 = vpop.f32.mrb[0].mxu0
    %v476 = vadd.f32 0.0, %v475
    %v477 = vpop.f32.mrb[0].mxu0
    %478 = vmatprep.mubr.f32.mxu0 0.0
    %479 = vmatmul.mubr.f32.gmra.mrb[0].mxu0 %v246
    %v480 = vpop.f32.mrb[0].mxu0
    %v481 = vadd.f32 0.0, %v480
    %v482 = vpop.f32.mrb[0].mxu0
    %483 = vmatprep.mubr.f32.mxu0 0.0
    %484 = vmatmul.mubr.f32.gmra.mrb[0].mxu0 %v247
    %v485 = vpop.f32.mrb[0].mxu0
    %v486 = vadd.f32 0.0, %v485
    %v487 = vpop.f32.mrb[0].mxu0
    %488 = vdwg.mxu0
    %v489 = vmul.f32 %v331, 10.0
    %v490 = vmul.f32 %v336, 10.0
    %v491 = vmul.f32 %v341, 10.0
    %v492 = vmul.f32 %v346, 10.0
    %v493 = vmul.f32 %v351, 10.0
    %v494 = vmul.f32 %v356, 10.0
    %v495 = vmul.f32 %v361, 10.0
    %v496 = vmul.f32 %v366, 10.0
    %v497 = vmul.f32 %v371, 10.0
    %v498 = vmul.f32 %v376, 10.0
    %v499 = vmul.f32 %v381, 10.0
    %v500 = vmul.f32 %v386, 10.0
    %v501 = vmul.f32 %v391, 10.0
    %v502 = vmul.f32 %v396, 10.0
    %v503 = vmul.f32 %v401, 10.0
    %v504 = vmul.f32 %v406, 10.0
    %v505 = vmul.f32 %v411, 10.0
    %v506 = vmul.f32 %v416, 10.0
    %v507 = vmul.f32 %v421, 10.0
    %v508 = vmul.f32 %v426, 10.0
    %v509 = vmul.f32 %v431, 10.0
    %v510 = vmul.f32 %v436, 10.0
    %v511 = vmul.f32 %v441, 10.0
    %v512 = vmul.f32 %v446, 10.0
    %v513 = vmul.f32 %v451, 10.0
    %v514 = vmul.f32 %v456, 10.0
    %v515 = vmul.f32 %v461, 10.0
    %v516 = vmul.f32 %v466, 10.0
    %v517 = vmul.f32 %v471, 10.0
    %v518 = vmul.f32 %v476, 10.0
    %v519 = vmul.f32 %v481, 10.0
    %v520 = vmul.f32 %v486, 10.0
    %v521 = vlaneseq
    %v522 = vand.u32 %v521, 127
    %vm523 = vcmp.lt.s32.totalorder %v522, 64
    %v524 = vsel %vm523, %v489, -inf
    %v525 = vsel %vm523, %v490, -inf
    %v526 = vsel %vm523, %v491, -inf
    %v527 = vsel %vm523, %v492, -inf
    %v528 = vsel %vm523, %v493, -inf
    %v529 = vsel %vm523, %v494, -inf
    %v530 = vsel %vm523, %v495, -inf
    %v531 = vsel %vm523, %v496, -inf
    %v532 = vsel %vm523, %v497, -inf
    %v533 = vsel %vm523, %v498, -inf
    %v534 = vsel %vm523, %v499, -inf
    %v535 = vsel %vm523, %v500, -inf
    %v536 = vsel %vm523, %v501, -inf
    %v537 = vsel %vm523, %v502, -inf
    %v538 = vsel %vm523, %v503, -inf
    %v539 = vsel %vm523, %v504, -inf
    %v540 = vsel %vm523, %v505, -inf
    %v541 = vsel %vm523, %v506, -inf
    %v542 = vsel %vm523, %v507, -inf
    %v543 = vsel %vm523, %v508, -inf
    %v544 = vsel %vm523, %v509, -inf
    %v545 = vsel %vm523, %v510, -inf
    %v546 = vsel %vm523, %v511, -inf
    %v547 = vsel %vm523, %v512, -inf
    %v548 = vsel %vm523, %v513, -inf
    %v549 = vsel %vm523, %v514, -inf
    %v550 = vsel %vm523, %v515, -inf
    %v551 = vsel %vm523, %v516, -inf
    %v552 = vsel %vm523, %v517, -inf
    %v553 = vsel %vm523, %v518, -inf
    %v554 = vsel %vm523, %v519, -inf
    %v555 = vsel %vm523, %v520, -inf
    %556 = vmax.xlane.f32.xlu0 %v524
    %v557 = vpop.xlane.xlu0 %556
    %558 = vmax.xlane.f32.xlu0 %v525
    %v559 = vpop.xlane.xlu0 %558
    %560 = vmax.xlane.f32.xlu0 %v526
    %v561 = vpop.xlane.xlu0 %560
    %562 = vmax.xlane.f32.xlu0 %v527
    %v563 = vpop.xlane.xlu0 %562
    %564 = vmax.xlane.f32.xlu0 %v528
    %v565 = vpop.xlane.xlu0 %564
    %566 = vmax.xlane.f32.xlu0 %v529
    %v567 = vpop.xlane.xlu0 %566
    %568 = vmax.xlane.f32.xlu0 %v530
    %v569 = vpop.xlane.xlu0 %568
    %570 = vmax.xlane.f32.xlu0 %v531
    %v571 = vpop.xlane.xlu0 %570
    %572 = vmax.xlane.f32.xlu0 %v532
    %v573 = vpop.xlane.xlu0 %572
    %574 = vmax.xlane.f32.xlu0 %v533
    %v575 = vpop.xlane.xlu0 %574
    %576 = vmax.xlane.f32.xlu0 %v534
    %v577 = vpop.xlane.xlu0 %576
    %578 = vmax.xlane.f32.xlu0 %v535
    %v579 = vpop.xlane.xlu0 %578
    %580 = vmax.xlane.f32.xlu0 %v536
    %v581 = vpop.xlane.xlu0 %580
    %582 = vmax.xlane.f32.xlu0 %v537
    %v583 = vpop.xlane.xlu0 %582
    %584 = vmax.xlane.f32.xlu0 %v538
    %v585 = vpop.xlane.xlu0 %584
    %586 = vmax.xlane.f32.xlu0 %v539
    %v587 = vpop.xlane.xlu0 %586
    %588 = vmax.xlane.f32.xlu0 %v540
    %v589 = vpop.xlane.xlu0 %588
    %590 = vmax.xlane.f32.xlu0 %v541
    %v591 = vpop.xlane.xlu0 %590
    %592 = vmax.xlane.f32.xlu0 %v542
    %v593 = vpop.xlane.xlu0 %592
    %594 = vmax.xlane.f32.xlu0 %v543
    %v595 = vpop.xlane.xlu0 %594
    %596 = vmax.xlane.f32.xlu0 %v544
    %v597 = vpop.xlane.xlu0 %596
    %598 = vmax.xlane.f32.xlu0 %v545
    %v599 = vpop.xlane.xlu0 %598
    %600 = vmax.xlane.f32.xlu0 %v546
    %v601 = vpop.xlane.xlu0 %600
    %602 = vmax.xlane.f32.xlu0 %v547
    %v603 = vpop.xlane.xlu0 %602
    %604 = vmax.xlane.f32.xlu0 %v548
    %v605 = vpop.xlane.xlu0 %604
    %606 = vmax.xlane.f32.xlu0 %v549
    %v607 = vpop.xlane.xlu0 %606
    %608 = vmax.xlane.f32.xlu0 %v550
    %v609 = vpop.xlane.xlu0 %608
    %610 = vmax.xlane.f32.xlu0 %v551
    %v611 = vpop.xlane.xlu0 %610
    %612 = vmax.xlane.f32.xlu0 %v552
    %v613 = vpop.xlane.xlu0 %612
    %614 = vmax.xlane.f32.xlu0 %v553
    %v615 = vpop.xlane.xlu0 %614
    %616 = vmax.xlane.f32.xlu0 %v554
    %v617 = vpop.xlane.xlu0 %616
    %618 = vmax.xlane.f32.xlu0 %v555
    %v619 = vpop.xlane.xlu0 %618
    %v620 = vsub.f32 %v524, %v557
    %v621 = vsub.f32 %v525, %v559
    %v622 = vsub.f32 %v526, %v561
    %v623 = vsub.f32 %v527, %v563
    %v624 = vsub.f32 %v528, %v565
    %v625 = vsub.f32 %v529, %v567
    %v626 = vsub.f32 %v530, %v569
    %v627 = vsub.f32 %v531, %v571
    %v628 = vsub.f32 %v532, %v573
    %v629 = vsub.f32 %v533, %v575
    %v630 = vsub.f32 %v534, %v577
    %v631 = vsub.f32 %v535, %v579
    %v632 = vsub.f32 %v536, %v581
    %v633 = vsub.f32 %v537, %v583
    %v634 = vsub.f32 %v538, %v585
    %v635 = vsub.f32 %v539, %v587
    %v636 = vsub.f32 %v540, %v589
    %v637 = vsub.f32 %v541, %v591
    %v638 = vsub.f32 %v542, %v593
    %v639 = vsub.f32 %v543, %v595
    %v640 = vsub.f32 %v544, %v597
    %v641 = vsub.f32 %v545, %v599
    %v642 = vsub.f32 %v546, %v601
    %v643 = vsub.f32 %v547, %v603
    %v644 = vsub.f32 %v548, %v605
    %v645 = vsub.f32 %v549, %v607
    %v646 = vsub.f32 %v550, %v609
    %v647 = vsub.f32 %v551, %v611
    %v648 = vsub.f32 %v552, %v613
    %v649 = vsub.f32 %v553, %v615
    %v650 = vsub.f32 %v554, %v617
    %v651 = vsub.f32 %v555, %v619
    %v652 = vmul.f32 %v620, 1.442695
    %v653 = vpow.pop %v652
    %v654 = vmul.f32 %v621, 1.442695
    %v655 = vpow.pop %v654
    %v656 = vmul.f32 %v622, 1.442695
    %v657 = vpow.pop %v656
    %v658 = vmul.f32 %v623, 1.442695
    %v659 = vpow.pop %v658
    %v660 = vmul.f32 %v624, 1.442695
    %v661 = vpow.pop %v660
    %v662 = vmul.f32 %v625, 1.442695
    %v663 = vpow.pop %v662
    %v664 = vmul.f32 %v626, 1.442695
    %v665 = vpow.pop %v664
    %v666 = vmul.f32 %v627, 1.442695
    %v667 = vpow.pop %v666
    %v668 = vmul.f32 %v628, 1.442695
    %v669 = vpow.pop %v668
    %v670 = vmul.f32 %v629, 1.442695
    %v671 = vpow.pop %v670
    %v672 = vmul.f32 %v630, 1.442695
    %v673 = vpow.pop %v672
    %v674 = vmul.f32 %v631, 1.442695
    %v675 = vpow.pop %v674
    %v676 = vmul.f32 %v632, 1.442695
    %v677 = vpow.pop %v676
    %v678 = vmul.f32 %v633, 1.442695
    %v679 = vpow.pop %v678
    %v680 = vmul.f32 %v634, 1.442695
    %v681 = vpow.pop %v680
    %v682 = vmul.f32 %v635, 1.442695
    %v683 = vpow.pop %v682
    %v684 = vmul.f32 %v636, 1.442695
    %v685 = vpow.pop %v684
    %v686 = vmul.f32 %v637, 1.442695
    %v687 = vpow.pop %v686
    %v688 = vmul.f32 %v638, 1.442695
    %v689 = vpow.pop %v688
    %v690 = vmul.f32 %v639, 1.442695
    %v691 = vpow.pop %v690
    %v692 = vmul.f32 %v640, 1.442695
    %v693 = vpow.pop %v692
    %v694 = vmul.f32 %v641, 1.442695
    %v695 = vpow.pop %v694
    %v696 = vmul.f32 %v642, 1.442695
    %v697 = vpow.pop %v696
    %v698 = vmul.f32 %v643, 1.442695
    %v699 = vpow.pop %v698
    %v700 = vmul.f32 %v644, 1.442695
    %v701 = vpow.pop %v700
    %v702 = vmul.f32 %v645, 1.442695
    %v703 = vpow.pop %v702
    %v704 = vmul.f32 %v646, 1.442695
    %v705 = vpow.pop %v704
    %v706 = vmul.f32 %v647, 1.442695
    %v707 = vpow.pop %v706
    %v708 = vmul.f32 %v648, 1.442695
    %v709 = vpow.pop %v708
    %v710 = vmul.f32 %v649, 1.442695
    %v711 = vpow.pop %v710
    %v712 = vmul.f32 %v650, 1.442695
    %v713 = vpow.pop %v712
    %v714 = vmul.f32 %v651, 1.442695
    %v715 = vpow.pop %v714
    %716 = vadd.xlane.f32.xlu0 %v653
    %v717 = vpop.xlane.xlu0 %716
    %718 = vadd.xlane.f32.xlu0 %v655
    %v719 = vpop.xlane.xlu0 %718
    %720 = vadd.xlane.f32.xlu0 %v657
    %v721 = vpop.xlane.xlu0 %720
    %722 = vadd.xlane.f32.xlu0 %v659
    %v723 = vpop.xlane.xlu0 %722
    %724 = vadd.xlane.f32.xlu0 %v661
    %v725 = vpop.xlane.xlu0 %724
    %726 = vadd.xlane.f32.xlu0 %v663
    %v727 = vpop.xlane.xlu0 %726
    %728 = vadd.xlane.f32.xlu0 %v665
    %v729 = vpop.xlane.xlu0 %728
    %730 = vadd.xlane.f32.xlu0 %v667
    %v731 = vpop.xlane.xlu0 %730
    %732 = vadd.xlane.f32.xlu0 %v669
    %v733 = vpop.xlane.xlu0 %732
    %734 = vadd.xlane.f32.xlu0 %v671
    %v735 = vpop.xlane.xlu0 %734
    %736 = vadd.xlane.f32.xlu0 %v673
    %v737 = vpop.xlane.xlu0 %736
    %738 = vadd.xlane.f32.xlu0 %v675
    %v739 = vpop.xlane.xlu0 %738
    %740 = vadd.xlane.f32.xlu0 %v677
    %v741 = vpop.xlane.xlu0 %740
    %742 = vadd.xlane.f32.xlu0 %v679
    %v743 = vpop.xlane.xlu0 %742
    %744 = vadd.xlane.f32.xlu0 %v681
    %v745 = vpop.xlane.xlu0 %744
    %746 = vadd.xlane.f32.xlu0 %v683
    %v747 = vpop.xlane.xlu0 %746
    %748 = vadd.xlane.f32.xlu0 %v685
    %v749 = vpop.xlane.xlu0 %748
    %750 = vadd.xlane.f32.xlu0 %v687
    %v751 = vpop.xlane.xlu0 %750
    %752 = vadd.xlane.f32.xlu0 %v689
    %v753 = vpop.xlane.xlu0 %752
    %754 = vadd.xlane.f32.xlu0 %v691
    %v755 = vpop.xlane.xlu0 %754
    %756 = vadd.xlane.f32.xlu0 %v693
    %v757 = vpop.xlane.xlu0 %756
    %758 = vadd.xlane.f32.xlu0 %v695
    %v759 = vpop.xlane.xlu0 %758
    %760 = vadd.xlane.f32.xlu0 %v697
    %v761 = vpop.xlane.xlu0 %760
    %762 = vadd.xlane.f32.xlu0 %v699
    %v763 = vpop.xlane.xlu0 %762
    %764 = vadd.xlane.f32.xlu0 %v701
    %v765 = vpop.xlane.xlu0 %764
    %766 = vadd.xlane.f32.xlu0 %v703
    %v767 = vpop.xlane.xlu0 %766
    %768 = vadd.xlane.f32.xlu0 %v705
    %v769 = vpop.xlane.xlu0 %768
    %770 = vadd.xlane.f32.xlu0 %v707
    %v771 = vpop.xlane.xlu0 %770
    %772 = vadd.xlane.f32.xlu0 %v709
    %v773 = vpop.xlane.xlu0 %772
    %774 = vadd.xlane.f32.xlu0 %v711
    %v775 = vpop.xlane.xlu0 %774
    %776 = vadd.xlane.f32.xlu0 %v713
    %v777 = vpop.xlane.xlu0 %776
    %778 = vadd.xlane.f32.xlu0 %v715
    %v779 = vpop.xlane.xlu0 %778
    %v780 = vrcp.pop %v717
    %v781 = vrcp.pop %v719
    %v782 = vrcp.pop %v721
    %v783 = vrcp.pop %v723
    %v784 = vrcp.pop %v725
    %v785 = vrcp.pop %v727
    %v786 = vrcp.pop %v729
    %v787 = vrcp.pop %v731
    %v788 = vrcp.pop %v733
    %v789 = vrcp.pop %v735
    %v790 = vrcp.pop %v737
    %v791 = vrcp.pop %v739
    %v792 = vrcp.pop %v741
    %v793 = vrcp.pop %v743
    %v794 = vrcp.pop %v745
    %v795 = vrcp.pop %v747
    %v796 = vrcp.pop %v749
    %v797 = vrcp.pop %v751
    %v798 = vrcp.pop %v753
    %v799 = vrcp.pop %v755
    %v800 = vrcp.pop %v757
    %v801 = vrcp.pop %v759
    %v802 = vrcp.pop %v761
    %v803 = vrcp.pop %v763
    %v804 = vrcp.pop %v765
    %v805 = vrcp.pop %v767
    %v806 = vrcp.pop %v769
    %v807 = vrcp.pop %v771
    %v808 = vrcp.pop %v773
    %v809 = vrcp.pop %v775
    %v810 = vrcp.pop %v777
    %v811 = vrcp.pop %v779
    %v812 = vmul.f32 %v653, %v780
    %v813 = vmul.f32 %v655, %v781
    %v814 = vmul.f32 %v657, %v782
    %v815 = vmul.f32 %v659, %v783
    %v816 = vmul.f32 %v661, %v784
    %v817 = vmul.f32 %v663, %v785
    %v818 = vmul.f32 %v665, %v786
    %v819 = vmul.f32 %v667, %v787
    %v820 = vmul.f32 %v669, %v788
    %v821 = vmul.f32 %v671, %v789
    %v822 = vmul.f32 %v673, %v790
    %v823 = vmul.f32 %v675, %v791
    %v824 = vmul.f32 %v677, %v792
    %v825 = vmul.f32 %v679, %v793
    %v826 = vmul.f32 %v681, %v794
    %v827 = vmul.f32 %v683, %v795
    %v828 = vmul.f32 %v685, %v796
    %v829 = vmul.f32 %v687, %v797
    %v830 = vmul.f32 %v689, %v798
    %v831 = vmul.f32 %v691, %v799
    %v832 = vmul.f32 %v693, %v800
    %v833 = vmul.f32 %v695, %v801
    %v834 = vmul.f32 %v697, %v802
    %v835 = vmul.f32 %v699, %v803
    %v836 = vmul.f32 %v701, %v804
    %v837 = vmul.f32 %v703, %v805
    %v838 = vmul.f32 %v705, %v806
    %v839 = vmul.f32 %v707, %v807
    %v840 = vmul.f32 %v709, %v808
    %v841 = vmul.f32 %v711, %v809
    %v842 = vmul.f32 %v713, %v810
    %v843 = vmul.f32 %v715, %v811
    %v844 = vld [vmem:[#allocation7] sm:$0xff]
    %v845 = vld [vmem:[#allocation7 + $0x8] sm:$0xff]
    %v846 = vld [vmem:[#allocation7 + $0x10] sm:$0xff]
    %v847 = vld [vmem:[#allocation7 + $0x18] sm:$0xff]
    %v848 = vld [vmem:[#allocation7 + $0x20] sm:$0xff]
    %v849 = vld [vmem:[#allocation7 + $0x28] sm:$0xff]
    %v850 = vld [vmem:[#allocation7 + $0x30] sm:$0xff]
    %v851 = vld [vmem:[#allocation7 + $0x38] sm:$0xff]
    %v852 = vld [vmem:[#allocation7 + $0x40] sm:$0xff]
    %v853 = vld [vmem:[#allocation7 + $0x48] sm:$0xff]
    %v854 = vld [vmem:[#allocation7 + $0x50] sm:$0xff]
    %v855 = vld [vmem:[#allocation7 + $0x58] sm:$0xff]
    %v856 = vld [vmem:[#allocation7 + $0x60] sm:$0xff]
    %v857 = vld [vmem:[#allocation7 + $0x68] sm:$0xff]
    %v858 = vld [vmem:[#allocation7 + $0x70] sm:$0xff]
    %v859 = vld [vmem:[#allocation7 + $0x78] sm:$0xff]
    %860 = vmatprep.subr.mxu0 0.0
    %861 = vmatpush1.msra.mxu0 %v844
    %862 = vmatprep.subr.mxu0 0.0
    %863 = vmatpush1.msra.mxu0 %v845
    %864 = vmatprep.subr.mxu0 0.0
    %865 = vmatpush1.msra.mxu0 %v846
    %866 = vmatprep.subr.mxu0 0.0
    %867 = vmatpush1.msra.mxu0 %v847
    %868 = vmatprep.subr.mxu0 0.0
    %869 = vmatpush1.msra.mxu0 %v848
    %870 = vmatprep.subr.mxu0 0.0
    %871 = vmatpush1.msra.mxu0 %v849
    %872 = vmatprep.subr.mxu0 0.0
    %873 = vmatpush1.msra.mxu0 %v850
    %874 = vmatprep.subr.mxu0 0.0
    %875 = vmatpush1.msra.mxu0 %v851
    %876 = vmatprep.subr.mxu0 0.0
    %877 = vmatpush1.msra.mxu0 %v852
    %878 = vmatprep.subr.mxu0 0.0
    %879 = vmatpush1.msra.mxu0 %v853
    %880 = vmatprep.subr.mxu0 0.0
    %881 = vmatpush1.msra.mxu0 %v854
    %882 = vmatprep.subr.mxu0 0.0
    %883 = vmatpush1.msra.mxu0 %v855
    %884 = vmatprep.subr.mxu0 0.0
    %885 = vmatpush1.msra.mxu0 %v856
    %886 = vmatprep.subr.mxu0 0.0
    %887 = vmatpush1.msra.mxu0 %v857
    %888 = vmatprep.subr.mxu0 0.0
    %889 = vmatpush1.msra.mxu0 %v858
    %890 = vmatprep.subr.mxu0 0.0
    %891 = vmatpush1.msra.mxu0 %v859
    %892 = vmatprep.subr.mxu0 0.0
    %893 = vmatpush1.msra.mxu0 0.0
    %894 = vmatprep.subr.mxu0 0.0
    %895 = vmatpush1.msra.mxu0 0.0
    %896 = vmatprep.subr.mxu0 0.0
    %897 = vmatpush1.msra.mxu0 0.0
    %898 = vmatprep.subr.mxu0 0.0
    %899 = vmatpush1.msra.mxu0 0.0
    %900 = vmatprep.subr.mxu0 0.0
    %901 = vmatpush1.msra.mxu0 0.0
    %902 = vmatprep.subr.mxu0 0.0
    %903 = vmatpush1.msra.mxu0 0.0
    %904 = vmatprep.subr.mxu0 0.0
    %905 = vmatpush1.msra.mxu0 0.0
    %906 = vmatprep.subr.mxu0 0.0
    %907 = vmatpush1.msra.mxu0 0.0
    %908 = vmatprep.subr.mxu0 0.0
    %909 = vmatpush1.msra.mxu0 0.0
    %910 = vmatprep.subr.mxu0 0.0
    %911 = vmatpush1.msra.mxu0 0.0
    %912 = vmatprep.subr.mxu0 0.0
    %913 = vmatpush1.msra.mxu0 0.0
    %914 = vmatprep.subr.mxu0 0.0
    %915 = vmatpush1.msra.mxu0 0.0
    %916 = vmatprep.subr.mxu0 0.0
    %917 = vmatpush1.msra.mxu0 0.0
    %918 = vmatprep.subr.mxu0 0.0
    %919 = vmatpush1.msra.mxu0 0.0
    %920 = vmatprep.subr.mxu0 0.0
    %921 = vmatpush1.msra.mxu0 0.0
    %922 = vmatprep.subr.mxu0 0.0
    %923 = vmatpush1.msra.mxu0 0.0
    %924 = vmatprep.mubr.f32.mxu0 0.0
    %925 = vmatmul.mubr.f32.gmra.mrb[0].mxu0 %v812
    %v926 = vpop.f32.mrb[0].mxu0
    %v927 = vadd.f32 0.0, %v926
    %v928 = vpop.f32.mrb[0].mxu0
    %929 = vmatprep.mubr.f32.mxu0 0.0
    %930 = vmatmul.mubr.f32.gmra.mrb[0].mxu0 %v813
    %v931 = vpop.f32.mrb[0].mxu0
    %v932 = vadd.f32 0.0, %v931
    %v933 = vpop.f32.mrb[0].mxu0
    %934 = vmatprep.mubr.f32.mxu0 0.0
    %935 = vmatmul.mubr.f32.gmra.mrb[0].mxu0 %v814
    %v936 = vpop.f32.mrb[0].mxu0
    %v937 = vadd.f32 0.0, %v936
    %v938 = vpop.f32.mrb[0].mxu0
    %939 = vmatprep.mubr.f32.mxu0 0.0
    %940 = vmatmul.mubr.f32.gmra.mrb[0].mxu0 %v815
    %v941 = vpop.f32.mrb[0].mxu0
    %v942 = vadd.f32 0.0, %v941
    %v943 = vpop.f32.mrb[0].mxu0
    %944 = vmatprep.mubr.f32.mxu0 0.0
    %945 = vmatmul.mubr.f32.gmra.mrb[0].mxu0 %v816
    %v946 = vpop.f32.mrb[0].mxu0
    %v947 = vadd.f32 0.0, %v946
    %v948 = vpop.f32.mrb[0].mxu0
    %949 = vmatprep.mubr.f32.mxu0 0.0
    %950 = vmatmul.mubr.f32.gmra.mrb[0].mxu0 %v817
    %v951 = vpop.f32.mrb[0].mxu0
    %v952 = vadd.f32 0.0, %v951
    %v953 = vpop.f32.mrb[0].mxu0
    %954 = vmatprep.mubr.f32.mxu0 0.0
    %955 = vmatmul.mubr.f32.gmra.mrb[0].mxu0 %v818
    %v956 = vpop.f32.mrb[0].mxu0
    %v957 = vadd.f32 0.0, %v956
    %v958 = vpop.f32.mrb[0].mxu0
    %959 = vmatprep.mubr.f32.mxu0 0.0
    %960 = vmatmul.mubr.f32.gmra.mrb[0].mxu0 %v819
    %v961 = vpop.f32.mrb[0].mxu0
    %v962 = vadd.f32 0.0, %v961
    %v963 = vpop.f32.mrb[0].mxu0
    %964 = vmatprep.mubr.f32.mxu0 0.0
    %965 = vmatmul.mubr.f32.gmra.mrb[0].mxu0 %v820
    %v966 = vpop.f32.mrb[0].mxu0
    %v967 = vadd.f32 0.0, %v966
    %v968 = vpop.f32.mrb[0].mxu0
    %969 = vmatprep.mubr.f32.mxu0 0.0
    %970 = vmatmul.mubr.f32.gmra.mrb[0].mxu0 %v821
    %v971 = vpop.f32.mrb[0].mxu0
    %v972 = vadd.f32 0.0, %v971
    %v973 = vpop.f32.mrb[0].mxu0
    %974 = vmatprep.mubr.f32.mxu0 0.0
    %975 = vmatmul.mubr.f32.gmra.mrb[0].mxu0 %v822
    %v976 = vpop.f32.mrb[0].mxu0
    %v977 = vadd.f32 0.0, %v976
    %v978 = vpop.f32.mrb[0].mxu0
    %979 = vmatprep.mubr.f32.mxu0 0.0
    %980 = vmatmul.mubr.f32.gmra.mrb[0].mxu0 %v823
    %v981 = vpop.f32.mrb[0].mxu0
    %v982 = vadd.f32 0.0, %v981
    %v983 = vpop.f32.mrb[0].mxu0
    %984 = vmatprep.mubr.f32.mxu0 0.0
    %985 = vmatmul.mubr.f32.gmra.mrb[0].mxu0 %v824
    %v986 = vpop.f32.mrb[0].mxu0
    %v987 = vadd.f32 0.0, %v986
    %v988 = vpop.f32.mrb[0].mxu0
    %989 = vmatprep.mubr.f32.mxu0 0.0
    %990 = vmatmul.mubr.f32.gmra.mrb[0].mxu0 %v825
    %v991 = vpop.f32.mrb[0].mxu0
    %v992 = vadd.f32 0.0, %v991
    %v993 = vpop.f32.mrb[0].mxu0
    %994 = vmatprep.mubr.f32.mxu0 0.0
    %995 = vmatmul.mubr.f32.gmra.mrb[0].mxu0 %v826
    %v996 = vpop.f32.mrb[0].mxu0
    %v997 = vadd.f32 0.0, %v996
    %v998 = vpop.f32.mrb[0].mxu0
    %999 = vmatprep.mubr.f32.mxu0 0.0
    %1000 = vmatmul.mubr.f32.gmra.mrb[0].mxu0 %v827
    %v1001 = vpop.f32.mrb[0].mxu0
    %v1002 = vadd.f32 0.0, %v1001
    %v1003 = vpop.f32.mrb[0].mxu0
    %1004 = vmatprep.mubr.f32.mxu0 0.0
    %1005 = vmatmul.mubr.f32.gmra.mrb[0].mxu0 %v828
    %v1006 = vpop.f32.mrb[0].mxu0
    %v1007 = vadd.f32 0.0, %v1006
    %v1008 = vpop.f32.mrb[0].mxu0
    %1009 = vmatprep.mubr.f32.mxu0 0.0
    %1010 = vmatmul.mubr.f32.gmra.mrb[0].mxu0 %v829
    %v1011 = vpop.f32.mrb[0].mxu0
    %v1012 = vadd.f32 0.0, %v1011
    %v1013 = vpop.f32.mrb[0].mxu0
    %1014 = vmatprep.mubr.f32.mxu0 0.0
    %1015 = vmatmul.mubr.f32.gmra.mrb[0].mxu0 %v830
    %v1016 = vpop.f32.mrb[0].mxu0
    %v1017 = vadd.f32 0.0, %v1016
    %v1018 = vpop.f32.mrb[0].mxu0
    %1019 = vmatprep.mubr.f32.mxu0 0.0
    %1020 = vmatmul.mubr.f32.gmra.mrb[0].mxu0 %v831
    %v1021 = vpop.f32.mrb[0].mxu0
    %v1022 = vadd.f32 0.0, %v1021
    %v1023 = vpop.f32.mrb[0].mxu0
    %1024 = vmatprep.mubr.f32.mxu0 0.0
    %1025 = vmatmul.mubr.f32.gmra.mrb[0].mxu0 %v832
    %v1026 = vpop.f32.mrb[0].mxu0
    %v1027 = vadd.f32 0.0, %v1026
    %v1028 = vpop.f32.mrb[0].mxu0
    %1029 = vmatprep.mubr.f32.mxu0 0.0
    %1030 = vmatmul.mubr.f32.gmra.mrb[0].mxu0 %v833
    %v1031 = vpop.f32.mrb[0].mxu0
    %v1032 = vadd.f32 0.0, %v1031
    %v1033 = vpop.f32.mrb[0].mxu0
    %1034 = vmatprep.mubr.f32.mxu0 0.0
    %1035 = vmatmul.mubr.f32.gmra.mrb[0].mxu0 %v834
    %v1036 = vpop.f32.mrb[0].mxu0
    %v1037 = vadd.f32 0.0, %v1036
    %v1038 = vpop.f32.mrb[0].mxu0
    %1039 = vmatprep.mubr.f32.mxu0 0.0
    %1040 = vmatmul.mubr.f32.gmra.mrb[0].mxu0 %v835
    %v1041 = vpop.f32.mrb[0].mxu0
    %v1042 = vadd.f32 0.0, %v1041
    %v1043 = vpop.f32.mrb[0].mxu0
    %1044 = vmatprep.mubr.f32.mxu0 0.0
    %1045 = vmatmul.mubr.f32.gmra.mrb[0].mxu0 %v836
    %v1046 = vpop.f32.mrb[0].mxu0
    %v1047 = vadd.f32 0.0, %v1046
    %v1048 = vpop.f32.mrb[0].mxu0
    %1049 = vmatprep.mubr.f32.mxu0 0.0
    %1050 = vmatmul.mubr.f32.gmra.mrb[0].mxu0 %v837
    %v1051 = vpop.f32.mrb[0].mxu0
    %v1052 = vadd.f32 0.0, %v1051
    %v1053 = vpop.f32.mrb[0].mxu0
    %1054 = vmatprep.mubr.f32.mxu0 0.0
    %1055 = vmatmul.mubr.f32.gmra.mrb[0].mxu0 %v838
    %v1056 = vpop.f32.mrb[0].mxu0
    %v1057 = vadd.f32 0.0, %v1056
    %v1058 = vpop.f32.mrb[0].mxu0
    %1059 = vmatprep.mubr.f32.mxu0 0.0
    %1060 = vmatmul.mubr.f32.gmra.mrb[0].mxu0 %v839
    %v1061 = vpop.f32.mrb[0].mxu0
    %v1062 = vadd.f32 0.0, %v1061
    %v1063 = vpop.f32.mrb[0].mxu0
    %1064 = vmatprep.mubr.f32.mxu0 0.0
    %1065 = vmatmul.mubr.f32.gmra.mrb[0].mxu0 %v840
    %v1066 = vpop.f32.mrb[0].mxu0
    %v1067 = vadd.f32 0.0, %v1066
    %v1068 = vpop.f32.mrb[0].mxu0
    %1069 = vmatprep.mubr.f32.mxu0 0.0
    %1070 = vmatmul.mubr.f32.gmra.mrb[0].mxu0 %v841
    %v1071 = vpop.f32.mrb[0].mxu0
    %v1072 = vadd.f32 0.0, %v1071
    %v1073 = vpop.f32.mrb[0].mxu0
    %1074 = vmatprep.mubr.f32.mxu0 0.0
    %1075 = vmatmul.mubr.f32.gmra.mrb[0].mxu0 %v842
    %v1076 = vpop.f32.mrb[0].mxu0
    %v1077 = vadd.f32 0.0, %v1076
    %v1078 = vpop.f32.mrb[0].mxu0
    %1079 = vmatprep.mubr.f32.mxu0 0.0
    %1080 = vmatmul.mubr.f32.gmra.mrb[0].mxu0 %v843
    %v1081 = vpop.f32.mrb[0].mxu0
    %v1082 = vadd.f32 0.0, %v1081
    %v1083 = vpop.f32.mrb[0].mxu0
    %1084 = vdwg.mxu0
    %v1085 = vmul.f32 %v927, %v927
    %v1086 = vmul.f32 %v932, %v932
    %v1087 = vmul.f32 %v937, %v937
    %v1088 = vmul.f32 %v942, %v942
    %v1089 = vmul.f32 %v947, %v947
    %v1090 = vmul.f32 %v952, %v952
    %v1091 = vmul.f32 %v957, %v957
    %v1092 = vmul.f32 %v962, %v962
    %v1093 = vmul.f32 %v967, %v967
    %v1094 = vmul.f32 %v972, %v972
    %v1095 = vmul.f32 %v977, %v977
    %v1096 = vmul.f32 %v982, %v982
    %v1097 = vmul.f32 %v987, %v987
    %v1098 = vmul.f32 %v992, %v992
    %v1099 = vmul.f32 %v997, %v997
    %v1100 = vmul.f32 %v1002, %v1002
    %v1101 = vmul.f32 %v1007, %v1007
    %v1102 = vmul.f32 %v1012, %v1012
    %v1103 = vmul.f32 %v1017, %v1017
    %v1104 = vmul.f32 %v1022, %v1022
    %v1105 = vmul.f32 %v1027, %v1027
    %v1106 = vmul.f32 %v1032, %v1032
    %v1107 = vmul.f32 %v1037, %v1037
    %v1108 = vmul.f32 %v1042, %v1042
    %v1109 = vmul.f32 %v1047, %v1047
    %v1110 = vmul.f32 %v1052, %v1052
    %v1111 = vmul.f32 %v1057, %v1057
    %v1112 = vmul.f32 %v1062, %v1062
    %v1113 = vmul.f32 %v1067, %v1067
    %v1114 = vmul.f32 %v1072, %v1072
    %v1115 = vmul.f32 %v1077, %v1077
    %v1116 = vmul.f32 %v1082, %v1082
    %1117 = vadd.xlane.f32.xlu0 %v1085
    %v1118 = vpop.xlane.xlu0 %1117
    %1119 = vadd.xlane.f32.xlu0 %v1086
    %v1120 = vpop.xlane.xlu0 %1119
    %1121 = vadd.xlane.f32.xlu0 %v1087
    %v1122 = vpop.xlane.xlu0 %1121
    %1123 = vadd.xlane.f32.xlu0 %v1088
    %v1124 = vpop.xlane.xlu0 %1123
    %1125 = vadd.xlane.f32.xlu0 %v1089
    %v1126 = vpop.xlane.xlu0 %1125
    %1127 = vadd.xlane.f32.xlu0 %v1090
    %v1128 = vpop.xlane.xlu0 %1127
    %1129 = vadd.xlane.f32.xlu0 %v1091
    %v1130 = vpop.xlane.xlu0 %1129
    %1131 = vadd.xlane.f32.xlu0 %v1092
    %v1132 = vpop.xlane.xlu0 %1131
    %1133 = vadd.xlane.f32.xlu0 %v1093
    %v1134 = vpop.xlane.xlu0 %1133
    %1135 = vadd.xlane.f32.xlu0 %v1094
    %v1136 = vpop.xlane.xlu0 %1135
    %1137 = vadd.xlane.f32.xlu0 %v1095
    %v1138 = vpop.xlane.xlu0 %1137
    %1139 = vadd.xlane.f32.xlu0 %v1096
    %v1140 = vpop.xlane.xlu0 %1139
    %1141 = vadd.xlane.f32.xlu0 %v1097
    %v1142 = vpop.xlane.xlu0 %1141
    %1143 = vadd.xlane.f32.xlu0 %v1098
    %v1144 = vpop.xlane.xlu0 %1143
    %1145 = vadd.xlane.f32.xlu0 %v1099
    %v1146 = vpop.xlane.xlu0 %1145
    %1147 = vadd.xlane.f32.xlu0 %v1100
    %v1148 = vpop.xlane.xlu0 %1147
    %1149 = vadd.xlane.f32.xlu0 %v1101
    %v1150 = vpop.xlane.xlu0 %1149
    %1151 = vadd.xlane.f32.xlu0 %v1102
    %v1152 = vpop.xlane.xlu0 %1151
    %1153 = vadd.xlane.f32.xlu0 %v1103
    %v1154 = vpop.xlane.xlu0 %1153
    %1155 = vadd.xlane.f32.xlu0 %v1104
    %v1156 = vpop.xlane.xlu0 %1155
    %1157 = vadd.xlane.f32.xlu0 %v1105
    %v1158 = vpop.xlane.xlu0 %1157
    %1159 = vadd.xlane.f32.xlu0 %v1106
    %v1160 = vpop.xlane.xlu0 %1159
    %1161 = vadd.xlane.f32.xlu0 %v1107
    %v1162 = vpop.xlane.xlu0 %1161
    %1163 = vadd.xlane.f32.xlu0 %v1108
    %v1164 = vpop.xlane.xlu0 %1163
    %1165 = vadd.xlane.f32.xlu0 %v1109
    %v1166 = vpop.xlane.xlu0 %1165
    %1167 = vadd.xlane.f32.xlu0 %v1110
    %v1168 = vpop.xlane.xlu0 %1167
    %1169 = vadd.xlane.f32.xlu0 %v1111
    %v1170 = vpop.xlane.xlu0 %1169
    %1171 = vadd.xlane.f32.xlu0 %v1112
    %v1172 = vpop.xlane.xlu0 %1171
    %1173 = vadd.xlane.f32.xlu0 %v1113
    %v1174 = vpop.xlane.xlu0 %1173
    %1175 = vadd.xlane.f32.xlu0 %v1114
    %v1176 = vpop.xlane.xlu0 %1175
    %1177 = vadd.xlane.f32.xlu0 %v1115
    %v1178 = vpop.xlane.xlu0 %1177
    %1179 = vadd.xlane.f32.xlu0 %v1116
    %v1180 = vpop.xlane.xlu0 %1179
    %v1181 = vrsqrt.pop %v1118
    %v1182 = vrsqrt.pop %v1120
    %v1183 = vrsqrt.pop %v1122
    %v1184 = vrsqrt.pop %v1124
    %v1185 = vrsqrt.pop %v1126
    %v1186 = vrsqrt.pop %v1128
    %v1187 = vrsqrt.pop %v1130
    %v1188 = vrsqrt.pop %v1132
    %v1189 = vrsqrt.pop %v1134
    %v1190 = vrsqrt.pop %v1136
    %v1191 = vrsqrt.pop %v1138
    %v1192 = vrsqrt.pop %v1140
    %v1193 = vrsqrt.pop %v1142
    %v1194 = vrsqrt.pop %v1144
    %v1195 = vrsqrt.pop %v1146
    %v1196 = vrsqrt.pop %v1148
    %v1197 = vrsqrt.pop %v1150
    %v1198 = vrsqrt.pop %v1152
    %v1199 = vrsqrt.pop %v1154
    %v1200 = vrsqrt.pop %v1156
    %v1201 = vrsqrt.pop %v1158
    %v1202 = vrsqrt.pop %v1160
    %v1203 = vrsqrt.pop %v1162
    %v1204 = vrsqrt.pop %v1164
    %v1205 = vrsqrt.pop %v1166
    %v1206 = vrsqrt.pop %v1168
    %v1207 = vrsqrt.pop %v1170
    %v1208 = vrsqrt.pop %v1172
    %v1209 = vrsqrt.pop %v1174
    %v1210 = vrsqrt.pop %v1176
    %v1211 = vrsqrt.pop %v1178
    %v1212 = vrsqrt.pop %v1180
    %v1213 = vmul.f32 %v927, %v1181
    %v1214 = vmul.f32 %v932, %v1182
    %v1215 = vmul.f32 %v937, %v1183
    %v1216 = vmul.f32 %v942, %v1184
    %v1217 = vmul.f32 %v947, %v1185
    %v1218 = vmul.f32 %v952, %v1186
    %v1219 = vmul.f32 %v957, %v1187
    %v1220 = vmul.f32 %v962, %v1188
    %v1221 = vmul.f32 %v967, %v1189
    %v1222 = vmul.f32 %v972, %v1190
    %v1223 = vmul.f32 %v977, %v1191
    %v1224 = vmul.f32 %v982, %v1192
    %v1225 = vmul.f32 %v987, %v1193
    %v1226 = vmul.f32 %v992, %v1194
    %v1227 = vmul.f32 %v997, %v1195
    %v1228 = vmul.f32 %v1002, %v1196
    %v1229 = vmul.f32 %v1007, %v1197
    %v1230 = vmul.f32 %v1012, %v1198
    %v1231 = vmul.f32 %v1017, %v1199
    %v1232 = vmul.f32 %v1022, %v1200
    %v1233 = vmul.f32 %v1027, %v1201
    %v1234 = vmul.f32 %v1032, %v1202
    %v1235 = vmul.f32 %v1037, %v1203
    %v1236 = vmul.f32 %v1042, %v1204
    %v1237 = vmul.f32 %v1047, %v1205
    %v1238 = vmul.f32 %v1052, %v1206
    %v1239 = vmul.f32 %v1057, %v1207
    %v1240 = vmul.f32 %v1062, %v1208
    %v1241 = vmul.f32 %v1067, %v1209
    %v1242 = vmul.f32 %v1072, %v1210
    %v1243 = vmul.f32 %v1077, %v1211
    %v1244 = vmul.f32 %v1082, %v1212
    %v1245 = vmul.f32 %v216, 0.5
    %v1246 = vmul.f32 %v217, 0.5
    %v1247 = vmul.f32 %v218, 0.5
    %v1248 = vmul.f32 %v219, 0.5
    %v1249 = vmul.f32 %v220, 0.5
    %v1250 = vmul.f32 %v221, 0.5
    %v1251 = vmul.f32 %v222, 0.5
    %v1252 = vmul.f32 %v223, 0.5
    %v1253 = vmul.f32 %v224, 0.5
    %v1254 = vmul.f32 %v225, 0.5
    %v1255 = vmul.f32 %v226, 0.5
    %v1256 = vmul.f32 %v227, 0.5
    %v1257 = vmul.f32 %v228, 0.5
    %v1258 = vmul.f32 %v229, 0.5
    %v1259 = vmul.f32 %v230, 0.5
    %v1260 = vmul.f32 %v231, 0.5
    %v1261 = vmul.f32 %v232, 0.5
    %v1262 = vmul.f32 %v233, 0.5
    %v1263 = vmul.f32 %v234, 0.5
    %v1264 = vmul.f32 %v235, 0.5
    %v1265 = vmul.f32 %v236, 0.5
    %v1266 = vmul.f32 %v237, 0.5
    %v1267 = vmul.f32 %v238, 0.5
    %v1268 = vmul.f32 %v239, 0.5
    %v1269 = vmul.f32 %v240, 0.5
    %v1270 = vmul.f32 %v241, 0.5
    %v1271 = vmul.f32 %v242, 0.5
    %v1272 = vmul.f32 %v243, 0.5
    %v1273 = vmul.f32 %v244, 0.5
    %v1274 = vmul.f32 %v245, 0.5
    %v1275 = vmul.f32 %v246, 0.5
    %v1276 = vmul.f32 %v247, 0.5
    %v1277 = vmul.f32 %v1213, 0.5
    %v1278 = vmul.f32 %v1214, 0.5
    %v1279 = vmul.f32 %v1215, 0.5
    %v1280 = vmul.f32 %v1216, 0.5
    %v1281 = vmul.f32 %v1217, 0.5
    %v1282 = vmul.f32 %v1218, 0.5
    %v1283 = vmul.f32 %v1219, 0.5
    %v1284 = vmul.f32 %v1220, 0.5
    %v1285 = vmul.f32 %v1221, 0.5
    %v1286 = vmul.f32 %v1222, 0.5
    %v1287 = vmul.f32 %v1223, 0.5
    %v1288 = vmul.f32 %v1224, 0.5
    %v1289 = vmul.f32 %v1225, 0.5
    %v1290 = vmul.f32 %v1226, 0.5
    %v1291 = vmul.f32 %v1227, 0.5
    %v1292 = vmul.f32 %v1228, 0.5
    %v1293 = vmul.f32 %v1229, 0.5
    %v1294 = vmul.f32 %v1230, 0.5
    %v1295 = vmul.f32 %v1231, 0.5
    %v1296 = vmul.f32 %v1232, 0.5
    %v1297 = vmul.f32 %v1233, 0.5
    %v1298 = vmul.f32 %v1234, 0.5
    %v1299 = vmul.f32 %v1235, 0.5
    %v1300 = vmul.f32 %v1236, 0.5
    %v1301 = vmul.f32 %v1237, 0.5
    %v1302 = vmul.f32 %v1238, 0.5
    %v1303 = vmul.f32 %v1239, 0.5
    %v1304 = vmul.f32 %v1240, 0.5
    %v1305 = vmul.f32 %v1241, 0.5
    %v1306 = vmul.f32 %v1242, 0.5
    %v1307 = vmul.f32 %v1243, 0.5
    %v1308 = vmul.f32 %v1244, 0.5
    %v1309 = vadd.f32 %v1245, %v1277
    %v1310 = vadd.f32 %v1246, %v1278
    %v1311 = vadd.f32 %v1247, %v1279
    %v1312 = vadd.f32 %v1248, %v1280
    %v1313 = vadd.f32 %v1249, %v1281
    %v1314 = vadd.f32 %v1250, %v1282
    %v1315 = vadd.f32 %v1251, %v1283
    %v1316 = vadd.f32 %v1252, %v1284
    %v1317 = vadd.f32 %v1253, %v1285
    %v1318 = vadd.f32 %v1254, %v1286
    %v1319 = vadd.f32 %v1255, %v1287
    %v1320 = vadd.f32 %v1256, %v1288
    %v1321 = vadd.f32 %v1257, %v1289
    %v1322 = vadd.f32 %v1258, %v1290
    %v1323 = vadd.f32 %v1259, %v1291
    %v1324 = vadd.f32 %v1260, %v1292
    %v1325 = vadd.f32 %v1261, %v1293
    %v1326 = vadd.f32 %v1262, %v1294
    %v1327 = vadd.f32 %v1263, %v1295
    %v1328 = vadd.f32 %v1264, %v1296
    %v1329 = vadd.f32 %v1265, %v1297
    %v1330 = vadd.f32 %v1266, %v1298
    %v1331 = vadd.f32 %v1267, %v1299
    %v1332 = vadd.f32 %v1268, %v1300
    %v1333 = vadd.f32 %v1269, %v1301
    %v1334 = vadd.f32 %v1270, %v1302
    %v1335 = vadd.f32 %v1271, %v1303
    %v1336 = vadd.f32 %v1272, %v1304
    %v1337 = vadd.f32 %v1273, %v1305
    %v1338 = vadd.f32 %v1274, %v1306
    %v1339 = vadd.f32 %v1275, %v1307
    %v1340 = vadd.f32 %v1276, %v1308
    %v1341 = vmul.f32 %v1309, %v1309
    %v1342 = vmul.f32 %v1310, %v1310
    %v1343 = vmul.f32 %v1311, %v1311
    %v1344 = vmul.f32 %v1312, %v1312
    %v1345 = vmul.f32 %v1313, %v1313
    %v1346 = vmul.f32 %v1314, %v1314
    %v1347 = vmul.f32 %v1315, %v1315
    %v1348 = vmul.f32 %v1316, %v1316
    %v1349 = vmul.f32 %v1317, %v1317
    %v1350 = vmul.f32 %v1318, %v1318
    %v1351 = vmul.f32 %v1319, %v1319
    %v1352 = vmul.f32 %v1320, %v1320
    %v1353 = vmul.f32 %v1321, %v1321
    %v1354 = vmul.f32 %v1322, %v1322
    %v1355 = vmul.f32 %v1323, %v1323
    %v1356 = vmul.f32 %v1324, %v1324
    %v1357 = vmul.f32 %v1325, %v1325
    %v1358 = vmul.f32 %v1326, %v1326
    %v1359 = vmul.f32 %v1327, %v1327
    %v1360 = vmul.f32 %v1328, %v1328
    %v1361 = vmul.f32 %v1329, %v1329
    %v1362 = vmul.f32 %v1330, %v1330
    %v1363 = vmul.f32 %v1331, %v1331
    %v1364 = vmul.f32 %v1332, %v1332
    %v1365 = vmul.f32 %v1333, %v1333
    %v1366 = vmul.f32 %v1334, %v1334
    %v1367 = vmul.f32 %v1335, %v1335
    %v1368 = vmul.f32 %v1336, %v1336
    %v1369 = vmul.f32 %v1337, %v1337
    %v1370 = vmul.f32 %v1338, %v1338
    %v1371 = vmul.f32 %v1339, %v1339
    %v1372 = vmul.f32 %v1340, %v1340
    %1373 = vadd.xlane.f32.xlu0 %v1341
    %v1374 = vpop.xlane.xlu0 %1373
    %1375 = vadd.xlane.f32.xlu0 %v1342
    %v1376 = vpop.xlane.xlu0 %1375
    %1377 = vadd.xlane.f32.xlu0 %v1343
    %v1378 = vpop.xlane.xlu0 %1377
    %1379 = vadd.xlane.f32.xlu0 %v1344
    %v1380 = vpop.xlane.xlu0 %1379
    %1381 = vadd.xlane.f32.xlu0 %v1345
    %v1382 = vpop.xlane.xlu0 %1381
    %1383 = vadd.xlane.f32.xlu0 %v1346
    %v1384 = vpop.xlane.xlu0 %1383
    %1385 = vadd.xlane.f32.xlu0 %v1347
    %v1386 = vpop.xlane.xlu0 %1385
    %1387 = vadd.xlane.f32.xlu0 %v1348
    %v1388 = vpop.xlane.xlu0 %1387
    %1389 = vadd.xlane.f32.xlu0 %v1349
    %v1390 = vpop.xlane.xlu0 %1389
    %1391 = vadd.xlane.f32.xlu0 %v1350
    %v1392 = vpop.xlane.xlu0 %1391
    %1393 = vadd.xlane.f32.xlu0 %v1351
    %v1394 = vpop.xlane.xlu0 %1393
    %1395 = vadd.xlane.f32.xlu0 %v1352
    %v1396 = vpop.xlane.xlu0 %1395
    %1397 = vadd.xlane.f32.xlu0 %v1353
    %v1398 = vpop.xlane.xlu0 %1397
    %1399 = vadd.xlane.f32.xlu0 %v1354
    %v1400 = vpop.xlane.xlu0 %1399
    %1401 = vadd.xlane.f32.xlu0 %v1355
    %v1402 = vpop.xlane.xlu0 %1401
    %1403 = vadd.xlane.f32.xlu0 %v1356
    %v1404 = vpop.xlane.xlu0 %1403
    %1405 = vadd.xlane.f32.xlu0 %v1357
    %v1406 = vpop.xlane.xlu0 %1405
    %1407 = vadd.xlane.f32.xlu0 %v1358
    %v1408 = vpop.xlane.xlu0 %1407
    %1409 = vadd.xlane.f32.xlu0 %v1359
    %v1410 = vpop.xlane.xlu0 %1409
    %1411 = vadd.xlane.f32.xlu0 %v1360
    %v1412 = vpop.xlane.xlu0 %1411
    %1413 = vadd.xlane.f32.xlu0 %v1361
    %v1414 = vpop.xlane.xlu0 %1413
    %1415 = vadd.xlane.f32.xlu0 %v1362
    %v1416 = vpop.xlane.xlu0 %1415
    %1417 = vadd.xlane.f32.xlu0 %v1363
    %v1418 = vpop.xlane.xlu0 %1417
    %1419 = vadd.xlane.f32.xlu0 %v1364
    %v1420 = vpop.xlane.xlu0 %1419
    %1421 = vadd.xlane.f32.xlu0 %v1365
    %v1422 = vpop.xlane.xlu0 %1421
    %1423 = vadd.xlane.f32.xlu0 %v1366
    %v1424 = vpop.xlane.xlu0 %1423
    %1425 = vadd.xlane.f32.xlu0 %v1367
    %v1426 = vpop.xlane.xlu0 %1425
    %1427 = vadd.xlane.f32.xlu0 %v1368
    %v1428 = vpop.xlane.xlu0 %1427
    %1429 = vadd.xlane.f32.xlu0 %v1369
    %v1430 = vpop.xlane.xlu0 %1429
    %1431 = vadd.xlane.f32.xlu0 %v1370
    %v1432 = vpop.xlane.xlu0 %1431
    %1433 = vadd.xlane.f32.xlu0 %v1371
    %v1434 = vpop.xlane.xlu0 %1433
    %1435 = vadd.xlane.f32.xlu0 %v1372
    %v1436 = vpop.xlane.xlu0 %1435
    %v1437 = vrsqrt.pop %v1374
    %v1438 = vrsqrt.pop %v1376
    %v1439 = vrsqrt.pop %v1378
    %v1440 = vrsqrt.pop %v1380
    %v1441 = vrsqrt.pop %v1382
    %v1442 = vrsqrt.pop %v1384
    %v1443 = vrsqrt.pop %v1386
    %v1444 = vrsqrt.pop %v1388
    %v1445 = vrsqrt.pop %v1390
    %v1446 = vrsqrt.pop %v1392
    %v1447 = vrsqrt.pop %v1394
    %v1448 = vrsqrt.pop %v1396
    %v1449 = vrsqrt.pop %v1398
    %v1450 = vrsqrt.pop %v1400
    %v1451 = vrsqrt.pop %v1402
    %v1452 = vrsqrt.pop %v1404
    %v1453 = vrsqrt.pop %v1406
    %v1454 = vrsqrt.pop %v1408
    %v1455 = vrsqrt.pop %v1410
    %v1456 = vrsqrt.pop %v1412
    %v1457 = vrsqrt.pop %v1414
    %v1458 = vrsqrt.pop %v1416
    %v1459 = vrsqrt.pop %v1418
    %v1460 = vrsqrt.pop %v1420
    %v1461 = vrsqrt.pop %v1422
    %v1462 = vrsqrt.pop %v1424
    %v1463 = vrsqrt.pop %v1426
    %v1464 = vrsqrt.pop %v1428
    %v1465 = vrsqrt.pop %v1430
    %v1466 = vrsqrt.pop %v1432
    %v1467 = vrsqrt.pop %v1434
    %v1468 = vrsqrt.pop %v1436
    %v1469 = vmul.f32 %v1309, %v1437
    %v1470 = vmul.f32 %v1310, %v1438
    %v1471 = vmul.f32 %v1311, %v1439
    %v1472 = vmul.f32 %v1312, %v1440
    %v1473 = vmul.f32 %v1313, %v1441
    %v1474 = vmul.f32 %v1314, %v1442
    %v1475 = vmul.f32 %v1315, %v1443
    %v1476 = vmul.f32 %v1316, %v1444
    %v1477 = vmul.f32 %v1317, %v1445
    %v1478 = vmul.f32 %v1318, %v1446
    %v1479 = vmul.f32 %v1319, %v1447
    %v1480 = vmul.f32 %v1320, %v1448
    %v1481 = vmul.f32 %v1321, %v1449
    %v1482 = vmul.f32 %v1322, %v1450
    %v1483 = vmul.f32 %v1323, %v1451
    %v1484 = vmul.f32 %v1324, %v1452
    %v1485 = vmul.f32 %v1325, %v1453
    %v1486 = vmul.f32 %v1326, %v1454
    %v1487 = vmul.f32 %v1327, %v1455
    %v1488 = vmul.f32 %v1328, %v1456
    %v1489 = vmul.f32 %v1329, %v1457
    %v1490 = vmul.f32 %v1330, %v1458
    %v1491 = vmul.f32 %v1331, %v1459
    %v1492 = vmul.f32 %v1332, %v1460
    %v1493 = vmul.f32 %v1333, %v1461
    %v1494 = vmul.f32 %v1334, %v1462
    %v1495 = vmul.f32 %v1335, %v1463
    %v1496 = vmul.f32 %v1336, %v1464
    %v1497 = vmul.f32 %v1337, %v1465
    %v1498 = vmul.f32 %v1338, %v1466
    %v1499 = vmul.f32 %v1339, %v1467
    %v1500 = vmul.f32 %v1340, %v1468
    %1501 = vst [vmem:[#allocation8] sm:$0xff] %v1469
    %1502 = vst [vmem:[#allocation8 + $0x8] sm:$0xff] %v1470
    %1503 = vst [vmem:[#allocation8 + $0x10] sm:$0xff] %v1471
    %1504 = vst [vmem:[#allocation8 + $0x18] sm:$0xff] %v1472
    %1505 = vst [vmem:[#allocation8 + $0x20] sm:$0xff] %v1473
    %1506 = vst [vmem:[#allocation8 + $0x28] sm:$0xff] %v1474
    %1507 = vst [vmem:[#allocation8 + $0x30] sm:$0xff] %v1475
    %1508 = vst [vmem:[#allocation8 + $0x38] sm:$0xff] %v1476
    %1509 = vst [vmem:[#allocation8 + $0x40] sm:$0xff] %v1477
    %1510 = vst [vmem:[#allocation8 + $0x48] sm:$0xff] %v1478
    %1511 = vst [vmem:[#allocation8 + $0x50] sm:$0xff] %v1479
    %1512 = vst [vmem:[#allocation8 + $0x58] sm:$0xff] %v1480
    %1513 = vst [vmem:[#allocation8 + $0x60] sm:$0xff] %v1481
    %1514 = vst [vmem:[#allocation8 + $0x68] sm:$0xff] %v1482
    %1515 = vst [vmem:[#allocation8 + $0x70] sm:$0xff] %v1483
    %1516 = vst [vmem:[#allocation8 + $0x78] sm:$0xff] %v1484
    %1517 = vst [vmem:[#allocation8 + $0x80] sm:$0xff] %v1485
    %1518 = vst [vmem:[#allocation8 + $0x88] sm:$0xff] %v1486
    %1519 = vst [vmem:[#allocation8 + $0x90] sm:$0xff] %v1487
    %1520 = vst [vmem:[#allocation8 + $0x98] sm:$0xff] %v1488
    %1521 = vst [vmem:[#allocation8 + $0xa0] sm:$0xff] %v1489
    %1522 = vst [vmem:[#allocation8 + $0xa8] sm:$0xff] %v1490
    %1523 = vst [vmem:[#allocation8 + $0xb0] sm:$0xff] %v1491
    %1524 = vst [vmem:[#allocation8 + $0xb8] sm:$0xff] %v1492
    %1525 = vst [vmem:[#allocation8 + $0xc0] sm:$0xff] %v1493
    %1526 = vst [vmem:[#allocation8 + $0xc8] sm:$0xff] %v1494
    %1527 = vst [vmem:[#allocation8 + $0xd0] sm:$0xff] %v1495
    %1528 = vst [vmem:[#allocation8 + $0xd8] sm:$0xff] %v1496
    %1529 = vst [vmem:[#allocation8 + $0xe0] sm:$0xff] %v1497
    %1530 = vst [vmem:[#allocation8 + $0xe8] sm:$0xff] %v1498
    %1531 = vst [vmem:[#allocation8 + $0xf0] sm:$0xff] %v1499
    %1532 = vst [vmem:[#allocation8 + $0xf8] sm:$0xff] %v1500
    // Predicated region
    $region26: #{tpu_custom_call.1} parent=1 // pred_check
      _
    $region27: #{tpu_custom_call.1} parent=1 // pred_check_branch
      %1534 = sbr.rel (0) target = $region29
    $region28: #{tpu_custom_call.1} parent=1 // pred_region
      %s1536 = ssub.s32 4096, 4096
      %1537 = vsyncadd [#allocation4], %s1536
      %s1538 = sshll.u32 [#allocation8], 4
      %s1539 = int_to_ptr.vmem [resolvable:$true] %s1538
      %1544 = dma.vmem_to_hbm [thread:$0]  %s1539, 4096, %s3, [#allocation4], 128, 128, 8
    $region29: #{tpu_custom_call.1} parent=1 // pred_fallthru
      _
    // Predicated region
    $region30: #{tpu_custom_call.1} parent=1 // pred_check
      _
    $region31: #{tpu_custom_call.1} parent=1 // pred_check_branch
      %1546 = sbr.rel (0) target = $region33
    $region32: #{tpu_custom_call.1} parent=1 // pred_region
      %1547 = dma.done [#allocation4], 4096
    $region33: #{tpu_custom_call.1} parent=1 // pred_fallthru
      _
    %1548 = vsyncpa [#allocation3], 1
    %1549 = vsyncpa [#allocation6], 1
    %1550 = vsyncpa [#allocation4], 1

</llo_original>
